<compile_context>
chip_gen: v7x
topology: tpu7x:2x2x1
jax: 0.10.0
libtpu: 0.0.40
codegen_flags: <defaults>
</compile_context>

<pallas_src>
import functools

import jax
import jax.numpy as jnp
from jax.experimental import pallas as pl
from jax.experimental.pallas import tpu as pltpu


def _round_up(x, m):
    return (x + m - 1) // m * m


def aux_head_kernel(x_ref, w1_ref, b1_ref, w2_ref, b2_ref, w3_ref, b3_ref,
                    out_ref, *, pool_stride):
    """One batch tile of the AuxiliaryHead forward, everything in VMEM.

    x_ref : [Nt, H, W, C]  channels-last (zero-padded over N)
    w1_ref: [C, 128]   (BN1 scale folded)     b1_ref: [1, 128]
    w2_ref: [512, 768] (BN2 scale folded)     b2_ref: [1, 768]
    w3_ref: [768, NCpad]                      b3_ref: [1, NCpad]
    out   : [Nt, NCpad]
    """
    x = jnp.maximum(x_ref[...], 0.0)                       # ReLU (f32)
    nt = x.shape[0]

    # AvgPool2d(5, stride=pool_stride, pad=0): 4 static 5x5 windows.
    # C stays on the lane axis; the window sums are sublane reductions.
    pooled = []
    for i, j in ((0, 0), (0, 1), (1, 0), (1, 1)):
        hi, wj = i * pool_stride, j * pool_stride
        win = x[:, hi:hi + 5, wj:wj + 5, :]                # [Nt, 5, 5, C]
        pooled.append(win.sum(axis=1).sum(axis=1) * (1.0 / 25.0))  # [Nt, C]
    pooled_cat = jnp.concatenate(pooled, axis=0)           # [4*Nt, C]

    # Conv2d(C, 128, 1x1) as a single MXU matmul; BN1 bias + ReLU.
    y = jnp.dot(pooled_cat, w1_ref[...],
                preferred_element_type=jnp.float32)        # [4*Nt, 128]
    y = jnp.maximum(y + b1_ref[...], 0.0)

    # Rearrange [4*Nt, 128] -> [Nt, 512], position-major columns (matches the
    # (kh, kw, c) row order of w2_ref).
    ycat = jnp.concatenate([y[k * nt:(k + 1) * nt, :] for k in range(4)],
                           axis=1)                         # [Nt, 512]

    # Conv2d(128, 768, 2x2) on a 2x2 map == one [Nt,512]@[512,768] matmul.
    z = jnp.dot(ycat, w2_ref[...], preferred_element_type=jnp.float32)
    z = jnp.maximum(z + b2_ref[...], 0.0)                  # BN2 bias + ReLU

    # Linear(768, n_classes) with the output padded to a lane-dense width.
    out_ref[...] = (jnp.dot(z, w3_ref[...],
                            preferred_element_type=jnp.float32) + b3_ref[...])


def aux_head_pallas(x, params, *, input_size, n_classes):
    """Glue: fold BN, reshape weights, tile the batch, call the Pallas kernel."""
    (W1, g1, be1, m1, v1, W2, g2, be2, m2, v2, W3, b3) = params
    eps = 1e-5
    N, C, H, _ = x.shape
    assert H == input_size and input_size in (7, 8)
    c_mid = W1.shape[0]                                    # 128
    c_out = W2.shape[0]                                    # 768
    pool_stride = input_size - 5

    # Fold eval-mode BatchNorm into weight scale + bias.
    s1 = g1 / jnp.sqrt(v1 + eps)
    b1 = (be1 - m1 * s1).reshape(1, c_mid).astype(jnp.float32)
    s2 = g2 / jnp.sqrt(v2 + eps)
    b2 = (be2 - m2 * s2).reshape(1, c_out).astype(jnp.float32)

    w1_k = (W1.T * s1[None, :]).astype(jnp.float32)        # [C, 128]
    # W2: [768, 128, 2, 2] -> [kh, kw, c, out] -> [4*128, 768]; fold BN2 scale.
    w2_k = (jnp.transpose(W2, (2, 3, 1, 0)).reshape(4 * c_mid, c_out)
            * s2[None, :]).astype(jnp.float32)

    # Pad the class dimension to a lane-dense width (multiple of 128).
    nc_pad = max(128, _round_up(n_classes, 128))
    w3_k = jnp.zeros((c_out, nc_pad), jnp.float32).at[:, :n_classes].set(
        W3.T.astype(jnp.float32))
    b3_k = jnp.zeros((1, nc_pad), jnp.float32).at[0, :n_classes].set(
        b3.astype(jnp.float32))

    # Channels-last input, batch tiled over a 1-D grid (zero-pad N to n_t).
    x_nhwc = jnp.transpose(x, (0, 2, 3, 1)).astype(jnp.float32)  # [N, H, W, C]
    row_bytes = H * H * C * 4
    n_t = int(min(128,
                  max(8, ((12 << 20) // (2 * row_bytes)) // 8 * 8),
                  _round_up(N, 8)))
    n_pad = _round_up(N, n_t)
    if n_pad != N:
        x_nhwc = jnp.pad(x_nhwc, ((0, n_pad - N), (0, 0), (0, 0), (0, 0)))
    grid = (n_pad // n_t,)

    # VMEM bound: double-buffered x/out tiles + resident weights (+ margin);
    # capped below v7x's 64 MiB physical VMEM.
    w_bytes = 4 * (w1_k.size + b1.size + w2_k.size + b2.size
                   + w3_k.size + b3_k.size)
    tile_bytes = 4 * (n_t * H * H * C + n_t * nc_pad)
    vmem_limit = int(min(48 << 20,
                         max(16 << 20, 2 * w_bytes + 4 * tile_bytes + (4 << 20))))

    kernel = functools.partial(aux_head_kernel, pool_stride=pool_stride)
    out = pl.pallas_call(
        kernel,
        out_shape=jax.ShapeDtypeStruct((n_pad, nc_pad), jnp.float32),
        grid=grid,
        in_specs=[
            pl.BlockSpec((n_t, H, H, C), lambda i: (i, 0, 0, 0)),   # x tile
            pl.BlockSpec((C, c_mid), lambda i: (0, 0)),             # w1 (resident)
            pl.BlockSpec((1, c_mid), lambda i: (0, 0)),             # b1
            pl.BlockSpec((4 * c_mid, c_out), lambda i: (0, 0)),     # w2
            pl.BlockSpec((1, c_out), lambda i: (0, 0)),             # b2
            pl.BlockSpec((c_out, nc_pad), lambda i: (0, 0)),        # w3
            pl.BlockSpec((1, nc_pad), lambda i: (0, 0)),            # b3
        ],
        out_specs=pl.BlockSpec((n_t, nc_pad), lambda i: (i, 0)),
        compiler_params=pltpu.CompilerParams(
            dimension_semantics=("parallel",),
            vmem_limit_bytes=vmem_limit),
    )(x_nhwc, w1_k, b1, w2_k, b2, w3_k, b3_k)
    return out[:N, :n_classes]


def aux_head_reference(x, params, *, input_size):
    """Independent pure-JAX reference mirroring the PyTorch forward (eval BN)."""
    (W1, g1, be1, m1, v1, W2, g2, be2, m2, v2, W3, b3) = params
    eps = 1e-5
    s = input_size - 5
    h = jnp.maximum(x, 0.0)
    rows = []
    for i in range(2):
        cols = []
        for j in range(2):
            cols.append(jnp.mean(h[:, :, i * s:i * s + 5, j * s:j * s + 5],
                                 axis=(2, 3)))
        rows.append(jnp.stack(cols, axis=-1))
    pool = jnp.stack(rows, axis=-2)                              # [N, C, 2, 2]
    y = jnp.einsum('ncij,kc->nkij', pool, W1)
    y = (y - m1[None, :, None, None]) / jnp.sqrt(v1 + eps)[None, :, None, None]
    y = y * g1[None, :, None, None] + be1[None, :, None, None]
    y = jnp.maximum(y, 0.0)
    z = jnp.einsum('ncij,kcij->nk', y, W2)
    z = (z - m2[None, :]) / jnp.sqrt(v2 + eps)[None, :] * g2[None, :] + be2[None, :]
    z = jnp.maximum(z, 0.0)
    return z @ W3.T + b3[None, :]


if __name__ == "__main__":
    N, C, input_size, n_classes = 2, 16, 8, 10
    key = jax.random.PRNGKey(0)
    ks = jax.random.split(key, 14)

    x = jax.random.normal(ks[0], (N, C, input_size, input_size), jnp.float32)

    # Deterministic synthetic parameters (shapes from AuxiliaryHead.__init__).
    W1 = jax.random.normal(ks[1], (128, C), jnp.float32) * 0.1           # Conv2d(C,128,1)
    g1 = jax.random.uniform(ks[2], (128,), jnp.float32, 0.5, 1.5)        # BN1
    be1 = jax.random.normal(ks[3], (128,), jnp.float32) * 0.1
    m1 = jax.random.normal(ks[4], (128,), jnp.float32) * 0.1
    v1 = jax.random.uniform(ks[5], (128,), jnp.float32, 0.5, 1.5)
    W2 = jax.random.normal(ks[6], (768, 128, 2, 2), jnp.float32) * 0.05  # Conv2d(128,768,2)
    g2 = jax.random.uniform(ks[7], (768,), jnp.float32, 0.5, 1.5)        # BN2
    be2 = jax.random.normal(ks[8], (768,), jnp.float32) * 0.1
    m2 = jax.random.normal(ks[9], (768,), jnp.float32) * 0.1
    v2 = jax.random.uniform(ks[10], (768,), jnp.float32, 0.5, 1.5)
    W3 = jax.random.normal(ks[11], (n_classes, 768), jnp.float32) * 0.05  # Linear
    b3 = jax.random.normal(ks[12], (n_classes,), jnp.float32) * 0.1

    params = (W1, g1, be1, m1, v1, W2, g2, be2, m2, v2, W3, b3)

    logits = aux_head_pallas(x, params, input_size=input_size,
                             n_classes=n_classes)
    logits = jax.block_until_ready(logits)

    ref = aux_head_reference(x, params, input_size=input_size)
    assert logits.shape == (N, n_classes)
    assert jnp.allclose(logits, ref, rtol=1e-3, atol=1e-3), (
        f"max abs err {jnp.max(jnp.abs(logits - ref))}")

    print("KERNEL_OK")
</pallas_src>

<mosaic_0001>
module attributes {stable_mosaic.version = 11 : i64} {
  func.func @aux_head_kernel(%arg0: i32, %arg1: memref<8x8x8x16xf32, #tpu.memory_space<vmem>>, %arg2: memref<16x128xf32, #tpu.memory_space<vmem>>, %arg3: memref<1x128xf32, #tpu.memory_space<vmem>>, %arg4: memref<512x768xf32, #tpu.memory_space<vmem>>, %arg5: memref<1x768xf32, #tpu.memory_space<vmem>>, %arg6: memref<768x128xf32, #tpu.memory_space<vmem>>, %arg7: memref<1x128xf32, #tpu.memory_space<vmem>>, %arg8: memref<8x128xf32, #tpu.memory_space<vmem>>) attributes {dimension_semantics = [#tpu.dimension_semantics<parallel>], iteration_bounds = array<i64: 1>, scalar_prefetch = 0 : i64, scratch_operands = 0 : i64, tpu.core_type = #tpu.core_type<tc>, window_params = [{transform_indices = @transform_0, window_bounds = array<i64: 8, 8, 8, 16>}, {pipeline_mode = #tpu.pipeline_mode<synchronous>, transform_indices = @transform_1, window_bounds = array<i64: 16, 128>}, {pipeline_mode = #tpu.pipeline_mode<synchronous>, transform_indices = @transform_2, window_bounds = array<i64: 1, 128>}, {pipeline_mode = #tpu.pipeline_mode<synchronous>, transform_indices = @transform_3, window_bounds = array<i64: 512, 768>}, {pipeline_mode = #tpu.pipeline_mode<synchronous>, transform_indices = @transform_4, window_bounds = array<i64: 1, 768>}, {pipeline_mode = #tpu.pipeline_mode<synchronous>, transform_indices = @transform_5, window_bounds = array<i64: 768, 128>}, {pipeline_mode = #tpu.pipeline_mode<synchronous>, transform_indices = @transform_6, window_bounds = array<i64: 1, 128>}, {transform_indices = @transform_7, window_bounds = array<i64: 8, 128>}]} {
    %c0 = arith.constant 0 : index
    %c0_0 = arith.constant 0 : index
    %c0_1 = arith.constant 0 : index
    %c0_2 = arith.constant 0 : index
    %0 = vector.load %arg1[%c0, %c0_0, %c0_1, %c0_2] : memref<8x8x8x16xf32, #tpu.memory_space<vmem>>, vector<8x8x8x16xf32>
    %cst = arith.constant 0.000000e+00 : f32
    %1 = vector.broadcast %cst : f32 to vector<8x8x8x16xf32>
    %2 = arith.maximumf %0, %1 : vector<8x8x8x16xf32>
    %3 = vector.extract_strided_slice %2 {offsets = [0, 0, 0, 0], sizes = [8, 5, 5, 16], strides = [1, 1, 1, 1]} : vector<8x8x8x16xf32> to vector<8x5x5x16xf32>
    %cst_3 = arith.constant dense<0.000000e+00> : vector<8x5x16xf32>
    %4 = vector.multi_reduction <add>, %3, %cst_3 [1] : vector<8x5x5x16xf32> to vector<8x5x16xf32>
    %cst_4 = arith.constant dense<0.000000e+00> : vector<8x16xf32>
    %5 = vector.multi_reduction <add>, %4, %cst_4 [1] : vector<8x5x16xf32> to vector<8x16xf32>
    %cst_5 = arith.constant 4.000000e-02 : f32
    %6 = vector.broadcast %cst_5 : f32 to vector<8x16xf32>
    %7 = arith.mulf %5, %6 : vector<8x16xf32>
    %8 = vector.extract_strided_slice %2 {offsets = [0, 0, 3, 0], sizes = [8, 5, 5, 16], strides = [1, 1, 1, 1]} : vector<8x8x8x16xf32> to vector<8x5x5x16xf32>
    %cst_6 = arith.constant dense<0.000000e+00> : vector<8x5x16xf32>
    %9 = vector.multi_reduction <add>, %8, %cst_6 [1] : vector<8x5x5x16xf32> to vector<8x5x16xf32>
    %cst_7 = arith.constant dense<0.000000e+00> : vector<8x16xf32>
    %10 = vector.multi_reduction <add>, %9, %cst_7 [1] : vector<8x5x16xf32> to vector<8x16xf32>
    %cst_8 = arith.constant 4.000000e-02 : f32
    %11 = vector.broadcast %cst_8 : f32 to vector<8x16xf32>
    %12 = arith.mulf %10, %11 : vector<8x16xf32>
    %13 = vector.extract_strided_slice %2 {offsets = [0, 3, 0, 0], sizes = [8, 5, 5, 16], strides = [1, 1, 1, 1]} : vector<8x8x8x16xf32> to vector<8x5x5x16xf32>
    %cst_9 = arith.constant dense<0.000000e+00> : vector<8x5x16xf32>
    %14 = vector.multi_reduction <add>, %13, %cst_9 [1] : vector<8x5x5x16xf32> to vector<8x5x16xf32>
    %cst_10 = arith.constant dense<0.000000e+00> : vector<8x16xf32>
    %15 = vector.multi_reduction <add>, %14, %cst_10 [1] : vector<8x5x16xf32> to vector<8x16xf32>
    %cst_11 = arith.constant 4.000000e-02 : f32
    %16 = vector.broadcast %cst_11 : f32 to vector<8x16xf32>
    %17 = arith.mulf %15, %16 : vector<8x16xf32>
    %18 = vector.extract_strided_slice %2 {offsets = [0, 3, 3, 0], sizes = [8, 5, 5, 16], strides = [1, 1, 1, 1]} : vector<8x8x8x16xf32> to vector<8x5x5x16xf32>
    %cst_12 = arith.constant dense<0.000000e+00> : vector<8x5x16xf32>
    %19 = vector.multi_reduction <add>, %18, %cst_12 [1] : vector<8x5x5x16xf32> to vector<8x5x16xf32>
    %cst_13 = arith.constant dense<0.000000e+00> : vector<8x16xf32>
    %20 = vector.multi_reduction <add>, %19, %cst_13 [1] : vector<8x5x16xf32> to vector<8x16xf32>
    %cst_14 = arith.constant 4.000000e-02 : f32
    %21 = vector.broadcast %cst_14 : f32 to vector<8x16xf32>
    %22 = arith.mulf %20, %21 : vector<8x16xf32>
    %23 = tpu.concatenate %7, %12, %17, %22 in 0 : vector<8x16xf32>, vector<8x16xf32>, vector<8x16xf32>, vector<8x16xf32> -> vector<32x16xf32>
    %c0_15 = arith.constant 0 : index
    %c0_16 = arith.constant 0 : index
    %24 = vector.load %arg2[%c0_15, %c0_16] : memref<16x128xf32, #tpu.memory_space<vmem>>, vector<16x128xf32>
    %cst_17 = arith.constant dense<0.000000e+00> : vector<32x128xf32>
    %25 = tpu.matmul %23, %24, %cst_17 {dimension_numbers = #tpu.dot_dimension_numbers<[1], [0], [0], [1], [0, 0, 1, 1], [], []>} : vector<32x16xf32>, vector<16x128xf32>, vector<32x128xf32> -> vector<32x128xf32>
    %c0_18 = arith.constant 0 : index
    %c0_19 = arith.constant 0 : index
    %26 = vector.load %arg3[%c0_18, %c0_19] : memref<1x128xf32, #tpu.memory_space<vmem>>, vector<1x128xf32>
    %27 = vector.broadcast %26 : vector<1x128xf32> to vector<32x128xf32>
    %28 = arith.addf %25, %27 : vector<32x128xf32>
    %cst_20 = arith.constant 0.000000e+00 : f32
    %29 = vector.broadcast %cst_20 : f32 to vector<32x128xf32>
    %30 = arith.maximumf %28, %29 : vector<32x128xf32>
    %31 = vector.extract_strided_slice %30 {offsets = [0, 0], sizes = [8, 128], strides = [1, 1]} : vector<32x128xf32> to vector<8x128xf32>
    %32 = vector.extract_strided_slice %30 {offsets = [8, 0], sizes = [8, 128], strides = [1, 1]} : vector<32x128xf32> to vector<8x128xf32>
    %33 = vector.extract_strided_slice %30 {offsets = [16, 0], sizes = [8, 128], strides = [1, 1]} : vector<32x128xf32> to vector<8x128xf32>
    %34 = vector.extract_strided_slice %30 {offsets = [24, 0], sizes = [8, 128], strides = [1, 1]} : vector<32x128xf32> to vector<8x128xf32>
    %35 = tpu.concatenate %31, %32, %33, %34 in 1 : vector<8x128xf32>, vector<8x128xf32>, vector<8x128xf32>, vector<8x128xf32> -> vector<8x512xf32>
    %c0_21 = arith.constant 0 : index
    %c0_22 = arith.constant 0 : index
    %36 = vector.load %arg4[%c0_21, %c0_22] : memref<512x768xf32, #tpu.memory_space<vmem>>, vector<512x768xf32>
    %cst_23 = arith.constant dense<0.000000e+00> : vector<8x768xf32>
    %37 = tpu.matmul %35, %36, %cst_23 {dimension_numbers = #tpu.dot_dimension_numbers<[1], [0], [0], [1], [0, 0, 1, 1], [], []>} : vector<8x512xf32>, vector<512x768xf32>, vector<8x768xf32> -> vector<8x768xf32>
    %c0_24 = arith.constant 0 : index
    %c0_25 = arith.constant 0 : index
    %38 = vector.load %arg5[%c0_24, %c0_25] : memref<1x768xf32, #tpu.memory_space<vmem>>, vector<1x768xf32>
    %39 = vector.broadcast %38 : vector<1x768xf32> to vector<8x768xf32>
    %40 = arith.addf %37, %39 : vector<8x768xf32>
    %cst_26 = arith.constant 0.000000e+00 : f32
    %41 = vector.broadcast %cst_26 : f32 to vector<8x768xf32>
    %42 = arith.maximumf %40, %41 : vector<8x768xf32>
    %c0_27 = arith.constant 0 : index
    %c0_28 = arith.constant 0 : index
    %43 = vector.load %arg6[%c0_27, %c0_28] : memref<768x128xf32, #tpu.memory_space<vmem>>, vector<768x128xf32>
    %cst_29 = arith.constant dense<0.000000e+00> : vector<8x128xf32>
    %44 = tpu.matmul %42, %43, %cst_29 {dimension_numbers = #tpu.dot_dimension_numbers<[1], [0], [0], [1], [0, 0, 1, 1], [], []>} : vector<8x768xf32>, vector<768x128xf32>, vector<8x128xf32> -> vector<8x128xf32>
    %c0_30 = arith.constant 0 : index
    %c0_31 = arith.constant 0 : index
    %45 = vector.load %arg7[%c0_30, %c0_31] : memref<1x128xf32, #tpu.memory_space<vmem>>, vector<1x128xf32>
    %46 = vector.broadcast %45 : vector<1x128xf32> to vector<8x128xf32>
    %47 = arith.addf %44, %46 : vector<8x128xf32>
    %c0_32 = arith.constant 0 : index
    %c0_33 = arith.constant 0 : index
    %48 = vector.load %arg8[%c0_32, %c0_33] : memref<8x128xf32, #tpu.memory_space<vmem>>, vector<8x128xf32>
    tpu.vector_store %arg8[%c0_32, %c0_33], %47 {strides = array<i32>} : memref<8x128xf32, #tpu.memory_space<vmem>>, vector<8x128xf32>,
    return
  }
  func.func @transform_0(%arg0: i32) -> (i32, i32, i32, i32) {
    %c0_i32 = arith.constant 0 : i32
    %c0_i32_0 = arith.constant 0 : i32
    %c0_i32_1 = arith.constant 0 : i32
    %c0_i32_2 = arith.constant 0 : i32
    return %arg0, %c0_i32, %c0_i32_0, %c0_i32_1 : i32, i32, i32, i32
  }
  func.func @transform_1(%arg0: i32) -> (i32, i32) {
    %c0_i32 = arith.constant 0 : i32
    %c0_i32_0 = arith.constant 0 : i32
    %c0_i32_1 = arith.constant 0 : i32
    return %c0_i32, %c0_i32_0 : i32, i32
  }
  func.func @transform_2(%arg0: i32) -> (i32, i32) {
    %c0_i32 = arith.constant 0 : i32
    %c0_i32_0 = arith.constant 0 : i32
    %c0_i32_1 = arith.constant 0 : i32
    return %c0_i32, %c0_i32_0 : i32, i32
  }
  func.func @transform_3(%arg0: i32) -> (i32, i32) {
    %c0_i32 = arith.constant 0 : i32
    %c0_i32_0 = arith.constant 0 : i32
    %c0_i32_1 = arith.constant 0 : i32
    return %c0_i32, %c0_i32_0 : i32, i32
  }
  func.func @transform_4(%arg0: i32) -> (i32, i32) {
    %c0_i32 = arith.constant 0 : i32
    %c0_i32_0 = arith.constant 0 : i32
    %c0_i32_1 = arith.constant 0 : i32
    return %c0_i32, %c0_i32_0 : i32, i32
  }
  func.func @transform_5(%arg0: i32) -> (i32, i32) {
    %c0_i32 = arith.constant 0 : i32
    %c0_i32_0 = arith.constant 0 : i32
    %c0_i32_1 = arith.constant 0 : i32
    return %c0_i32, %c0_i32_0 : i32, i32
  }
  func.func @transform_6(%arg0: i32) -> (i32, i32) {
    %c0_i32 = arith.constant 0 : i32
    %c0_i32_0 = arith.constant 0 : i32
    %c0_i32_1 = arith.constant 0 : i32
    return %c0_i32, %c0_i32_0 : i32, i32
  }
  func.func @transform_7(%arg0: i32) -> (i32, i32) {
    %c0_i32 = arith.constant 0 : i32
    %c0_i32_0 = arith.constant 0 : i32
    return %arg0, %c0_i32 : i32, i32
  }
}

</mosaic_0001>

<llo_original>
// kernel: tpu_custom_call.1
$region0: #{tpu_custom_call.1}
  #allocation0 [shape = 'u32[]', space=smem, size = 0x4, offset = 0x4, fixed_abs, tag = 'smem constant byte address 0x4 - core index']
  #allocation1 [shape = 'u32[144,128]{1,0:T(1,128)}', space=vmem, size = 0x12000, scoped, tag = 'internal scratch']
  %s0 = inlined_call_operand.hbm [shape: f32[8,8,8,16], index: 0, kind: input, shape index: {}]
  %s1 = inlined_call_operand.hbm [shape: f32[16,128], index: 1, kind: input, shape index: {}]
  %s2 = inlined_call_operand.hbm [shape: f32[1,128], index: 2, kind: input, shape index: {}]
  %s3 = inlined_call_operand.hbm [shape: f32[512,768], index: 3, kind: input, shape index: {}]
  %s4 = inlined_call_operand.hbm [shape: f32[1,768], index: 4, kind: input, shape index: {}]
  %s5 = inlined_call_operand.hbm [shape: f32[768,128], index: 5, kind: input, shape index: {}]
  %s6 = inlined_call_operand.hbm [shape: f32[1,128], index: 6, kind: input, shape index: {}]
  %s7 = inlined_call_operand.hbm [shape: f32[8,128], index: 7, kind: output, shape index: {}]
  %s8 = sld [smem:[#allocation0]]
  $region66: #{tpu_custom_call.1} parent=0
    _
  %s10 = ssub.s32 1, %s8
  %s11 = scalar_select 0, %s10, %s8
  $region1: #{tpu_custom_call.1} parent=0
    #allocation2 [shape = 'u8[262144]{0}', space=vmem, size = 0x40000, scoped, tag = 'input window, operand 0, single buffered']
    #allocation3 [shape = 's32[1]{0}', space=sflag, size = 0x4, scoped, tag = 'scoped memory for tpu_custom_call.1']
    #allocation4 [shape = 's32[1]{0}', space=sflag, size = 0x4, scoped, tag = 'scoped memory for tpu_custom_call.1']
    #allocation5 [shape = 'u8[8192]{0}', space=vmem, size = 0x2000, scoped, tag = 'input window, operand 1, single buffered']
    #allocation6 [shape = 's32[1]{0}', space=sflag, size = 0x4, scoped, tag = 'scoped memory for tpu_custom_call.1']
    #allocation7 [shape = 'u8[512]{0}', space=vmem, size = 0x400, scoped, tag = 'input window, operand 2, single buffered']
    #allocation8 [shape = 'u8[1572864]{0}', space=vmem, size = 0x180000, scoped, tag = 'input window, operand 3, single buffered']
    #allocation9 [shape = 's32[1]{0}', space=sflag, size = 0x4, scoped, tag = 'scoped memory for tpu_custom_call.1']
    #allocation10 [shape = 'u8[3072]{0}', space=vmem, size = 0xc00, scoped, tag = 'input window, operand 4, single buffered']
    #allocation11 [shape = 'u8[393216]{0}', space=vmem, size = 0x60000, scoped, tag = 'input window, operand 5, single buffered']
    #allocation12 [shape = 's32[1]{0}', space=sflag, size = 0x4, scoped, tag = 'scoped memory for tpu_custom_call.1']
    #allocation13 [shape = 'u8[512]{0}', space=vmem, size = 0x400, scoped, tag = 'input window, operand 6, single buffered']
    #allocation14 [shape = 'u8[4096]{0}', space=vmem, size = 0x1000, scoped, tag = 'output window, operand 0, single buffered']
    %12 = vsyncpa [#allocation3], 0
    %13 = vsyncpa [#allocation6], 0
    %14 = vsyncpa [#allocation9], 0
    %15 = vsyncpa [#allocation12], 0
    %16 = vsyncpa [#allocation4], 0
    // Predicated region
    $region2: #{tpu_custom_call.1} parent=1 // pred_check
      _
    $region3: #{tpu_custom_call.1} parent=1 // pred_check_branch
      %18 = sbr.rel (0) target = $region5
    $region4: #{tpu_custom_call.1} parent=1 // pred_region
      %s20 = ssub.s32 8192, 8192
      %21 = vsyncadd [#allocation3], %s20
      %s22 = sshll.u32 [#allocation2], 4
      %s23 = int_to_ptr.vmem [resolvable:$true] %s22
      %28 = dma.hbm_to_vmem [thread:$0]  %s0, 8192, %s23, [#allocation3], 128, 128, 8
    $region5: #{tpu_custom_call.1} parent=1 // pred_fallthru
      _
    // Predicated region
    $region6: #{tpu_custom_call.1} parent=1 // pred_check
      _
    $region7: #{tpu_custom_call.1} parent=1 // pred_check_branch
      %30 = sbr.rel (0) target = $region9
    $region8: #{tpu_custom_call.1} parent=1 // pred_region
      %s32 = ssub.s32 256, 256
      %33 = vsyncadd [#allocation6], %s32
      %s34 = sshll.u32 [#allocation5], 4
      %s35 = int_to_ptr.vmem [resolvable:$true] %s34
      %40 = dma.hbm_to_vmem [thread:$0]  %s1, 256, %s35, [#allocation6], 128, 128, 8
    $region9: #{tpu_custom_call.1} parent=1 // pred_fallthru
      _
    // Predicated region
    $region10: #{tpu_custom_call.1} parent=1 // pred_check
      _
    $region11: #{tpu_custom_call.1} parent=1 // pred_check_branch
      %42 = sbr.rel (0) target = $region13
    $region12: #{tpu_custom_call.1} parent=1 // pred_region
      %s44 = ssub.s32 16, 16
      %45 = vsyncadd [#allocation6], %s44
      %s47 = sshll.u32 [#allocation7], 4
      %s48 = int_to_ptr.vmem [resolvable:$true] %s47
      %50 = dma.hbm_to_vmem [thread:$0]  %s2, 16, %s48, [#allocation6]
    $region13: #{tpu_custom_call.1} parent=1 // pred_fallthru
      _
    // Predicated region
    $region14: #{tpu_custom_call.1} parent=1 // pred_check
      _
    $region15: #{tpu_custom_call.1} parent=1 // pred_check_branch
      %52 = sbr.rel (0) target = $region17
    $region16: #{tpu_custom_call.1} parent=1 // pred_region
      %s54 = ssub.s32 49152, 49152
      %55 = vsyncadd [#allocation9], %s54
      %s56 = sshll.u32 [#allocation8], 4
      %s57 = int_to_ptr.vmem [resolvable:$true] %s56
      %62 = dma.hbm_to_vmem [thread:$0]  %s3, 49152, %s57, [#allocation9], 768, 768, 48
    $region17: #{tpu_custom_call.1} parent=1 // pred_fallthru
      _
    // Predicated region
    $region18: #{tpu_custom_call.1} parent=1 // pred_check
      _
    $region19: #{tpu_custom_call.1} parent=1 // pred_check_branch
      %64 = sbr.rel (0) target = $region21
    $region20: #{tpu_custom_call.1} parent=1 // pred_region
      %s66 = ssub.s32 96, 96
      %67 = vsyncadd [#allocation9], %s66
      %s69 = sshll.u32 [#allocation10], 4
      %s70 = int_to_ptr.vmem [resolvable:$true] %s69
      %72 = dma.hbm_to_vmem [thread:$0]  %s4, 96, %s70, [#allocation9]
    $region21: #{tpu_custom_call.1} parent=1 // pred_fallthru
      _
    // Predicated region
    $region22: #{tpu_custom_call.1} parent=1 // pred_check
      _
    $region23: #{tpu_custom_call.1} parent=1 // pred_check_branch
      %74 = sbr.rel (0) target = $region25
    $region24: #{tpu_custom_call.1} parent=1 // pred_region
      %s76 = ssub.s32 12288, 12288
      %77 = vsyncadd [#allocation12], %s76
      %s78 = sshll.u32 [#allocation11], 4
      %s79 = int_to_ptr.vmem [resolvable:$true] %s78
      %84 = dma.hbm_to_vmem [thread:$0]  %s5, 12288, %s79, [#allocation12], 128, 128, 8
    $region25: #{tpu_custom_call.1} parent=1 // pred_fallthru
      _
    // Predicated region
    $region26: #{tpu_custom_call.1} parent=1 // pred_check
      _
    $region27: #{tpu_custom_call.1} parent=1 // pred_check_branch
      %86 = sbr.rel (0) target = $region29
    $region28: #{tpu_custom_call.1} parent=1 // pred_region
      %s88 = ssub.s32 16, 16
      %89 = vsyncadd [#allocation12], %s88
      %s91 = sshll.u32 [#allocation13], 4
      %s92 = int_to_ptr.vmem [resolvable:$true] %s91
      %94 = dma.hbm_to_vmem [thread:$0]  %s6, 16, %s92, [#allocation12]
    $region29: #{tpu_custom_call.1} parent=1 // pred_fallthru
      _
    // Predicated region
    $region30: #{tpu_custom_call.1} parent=1 // pred_check
      _
    $region31: #{tpu_custom_call.1} parent=1 // pred_check_branch
      %96 = sbr.rel (0) target = $region33
    $region32: #{tpu_custom_call.1} parent=1 // pred_region
      %97 = dma.done [#allocation3], 8192
    $region33: #{tpu_custom_call.1} parent=1 // pred_fallthru
      _
    // Predicated region
    $region34: #{tpu_custom_call.1} parent=1 // pred_check
      _
    $region35: #{tpu_custom_call.1} parent=1 // pred_check_branch
      %99 = sbr.rel (0) target = $region37
    $region36: #{tpu_custom_call.1} parent=1 // pred_region
      %100 = dma.done [#allocation6], 256
    $region37: #{tpu_custom_call.1} parent=1 // pred_fallthru
      _
    // Predicated region
    $region38: #{tpu_custom_call.1} parent=1 // pred_check
      _
    $region39: #{tpu_custom_call.1} parent=1 // pred_check_branch
      %102 = sbr.rel (0) target = $region41
    $region40: #{tpu_custom_call.1} parent=1 // pred_region
      %103 = dma.done [#allocation6], 16
    $region41: #{tpu_custom_call.1} parent=1 // pred_fallthru
      _
    // Predicated region
    $region42: #{tpu_custom_call.1} parent=1 // pred_check
      _
    $region43: #{tpu_custom_call.1} parent=1 // pred_check_branch
      %105 = sbr.rel (0) target = $region45
    $region44: #{tpu_custom_call.1} parent=1 // pred_region
      %106 = dma.done [#allocation9], 49152
    $region45: #{tpu_custom_call.1} parent=1 // pred_fallthru
      _
    // Predicated region
    $region46: #{tpu_custom_call.1} parent=1 // pred_check
      _
    $region47: #{tpu_custom_call.1} parent=1 // pred_check_branch
      %108 = sbr.rel (0) target = $region49
    $region48: #{tpu_custom_call.1} parent=1 // pred_region
      %109 = dma.done [#allocation9], 96
    $region49: #{tpu_custom_call.1} parent=1 // pred_fallthru
      _
    // Predicated region
    $region50: #{tpu_custom_call.1} parent=1 // pred_check
      _
    $region51: #{tpu_custom_call.1} parent=1 // pred_check_branch
      %111 = sbr.rel (0) target = $region53
    $region52: #{tpu_custom_call.1} parent=1 // pred_region
      %112 = dma.done [#allocation12], 12288
    $region53: #{tpu_custom_call.1} parent=1 // pred_fallthru
      _
    // Predicated region
    $region54: #{tpu_custom_call.1} parent=1 // pred_check
      _
    $region55: #{tpu_custom_call.1} parent=1 // pred_check_branch
      %114 = sbr.rel (0) target = $region57
    $region56: #{tpu_custom_call.1} parent=1 // pred_region
      %115 = dma.done [#allocation12], 16
    $region57: #{tpu_custom_call.1} parent=1 // pred_fallthru
      _
    %v116 = vld [vmem:[#allocation2] sm:$0xff]
    %v117 = vld [vmem:[#allocation2 + $0x8] sm:$0xff]
    %v118 = vld [vmem:[#allocation2 + $0x10] sm:$0xff]
    %v119 = vld [vmem:[#allocation2 + $0x18] sm:$0xff]
    %v120 = vld [vmem:[#allocation2 + $0x20] sm:$0xff]
    %v121 = vld [vmem:[#allocation2 + $0x28] sm:$0xff]
    %v122 = vld [vmem:[#allocation2 + $0x30] sm:$0xff]
    %v123 = vld [vmem:[#allocation2 + $0x38] sm:$0xff]
    %v124 = vld [vmem:[#allocation2 + $0x40] sm:$0xff]
    %v125 = vld [vmem:[#allocation2 + $0x48] sm:$0xff]
    %v126 = vld [vmem:[#allocation2 + $0x50] sm:$0xff]
    %v127 = vld [vmem:[#allocation2 + $0x58] sm:$0xff]
    %v128 = vld [vmem:[#allocation2 + $0x60] sm:$0xff]
    %v129 = vld [vmem:[#allocation2 + $0x68] sm:$0xff]
    %v130 = vld [vmem:[#allocation2 + $0x70] sm:$0xff]
    %v131 = vld [vmem:[#allocation2 + $0x78] sm:$0xff]
    %v132 = vld [vmem:[#allocation2 + $0x80] sm:$0xff]
    %v133 = vld [vmem:[#allocation2 + $0x88] sm:$0xff]
    %v134 = vld [vmem:[#allocation2 + $0x90] sm:$0xff]
    %v135 = vld [vmem:[#allocation2 + $0x98] sm:$0xff]
    %v136 = vld [vmem:[#allocation2 + $0xa0] sm:$0xff]
    %v137 = vld [vmem:[#allocation2 + $0xa8] sm:$0xff]
    %v138 = vld [vmem:[#allocation2 + $0xb0] sm:$0xff]
    %v139 = vld [vmem:[#allocation2 + $0xb8] sm:$0xff]
    %v140 = vld [vmem:[#allocation2 + $0xc0] sm:$0xff]
    %v141 = vld [vmem:[#allocation2 + $0xc8] sm:$0xff]
    %v142 = vld [vmem:[#allocation2 + $0xd0] sm:$0xff]
    %v143 = vld [vmem:[#allocation2 + $0xd8] sm:$0xff]
    %v144 = vld [vmem:[#allocation2 + $0xe0] sm:$0xff]
    %v145 = vld [vmem:[#allocation2 + $0xe8] sm:$0xff]
    %v146 = vld [vmem:[#allocation2 + $0xf0] sm:$0xff]
    %v147 = vld [vmem:[#allocation2 + $0xf8] sm:$0xff]
    %v148 = vld [vmem:[#allocation2 + $0x100] sm:$0xff]
    %v149 = vld [vmem:[#allocation2 + $0x108] sm:$0xff]
    %v150 = vld [vmem:[#allocation2 + $0x110] sm:$0xff]
    %v151 = vld [vmem:[#allocation2 + $0x118] sm:$0xff]
    %v152 = vld [vmem:[#allocation2 + $0x120] sm:$0xff]
    %v153 = vld [vmem:[#allocation2 + $0x128] sm:$0xff]
    %v154 = vld [vmem:[#allocation2 + $0x130] sm:$0xff]
    %v155 = vld [vmem:[#allocation2 + $0x138] sm:$0xff]
    %v156 = vld [vmem:[#allocation2 + $0x140] sm:$0xff]
    %v157 = vld [vmem:[#allocation2 + $0x148] sm:$0xff]
    %v158 = vld [vmem:[#allocation2 + $0x150] sm:$0xff]
    %v159 = vld [vmem:[#allocation2 + $0x158] sm:$0xff]
    %v160 = vld [vmem:[#allocation2 + $0x160] sm:$0xff]
    %v161 = vld [vmem:[#allocation2 + $0x168] sm:$0xff]
    %v162 = vld [vmem:[#allocation2 + $0x170] sm:$0xff]
    %v163 = vld [vmem:[#allocation2 + $0x178] sm:$0xff]
    %v164 = vld [vmem:[#allocation2 + $0x180] sm:$0xff]
    %v165 = vld [vmem:[#allocation2 + $0x188] sm:$0xff]
    %v166 = vld [vmem:[#allocation2 + $0x190] sm:$0xff]
    %v167 = vld [vmem:[#allocation2 + $0x198] sm:$0xff]
    %v168 = vld [vmem:[#allocation2 + $0x1a0] sm:$0xff]
    %v169 = vld [vmem:[#allocation2 + $0x1a8] sm:$0xff]
    %v170 = vld [vmem:[#allocation2 + $0x1b0] sm:$0xff]
    %v171 = vld [vmem:[#allocation2 + $0x1b8] sm:$0xff]
    %v172 = vld [vmem:[#allocation2 + $0x1c0] sm:$0xff]
    %v173 = vld [vmem:[#allocation2 + $0x1c8] sm:$0xff]
    %v174 = vld [vmem:[#allocation2 + $0x1d0] sm:$0xff]
    %v175 = vld [vmem:[#allocation2 + $0x1d8] sm:$0xff]
    %v176 = vld [vmem:[#allocation2 + $0x1e0] sm:$0xff]
    %v177 = vld [vmem:[#allocation2 + $0x1e8] sm:$0xff]
    %v178 = vld [vmem:[#allocation2 + $0x1f0] sm:$0xff]
    %v179 = vld [vmem:[#allocation2 + $0x1f8] sm:$0xff]
    %v180 = vmax.f32 %v116, 0.0
    %v181 = vmax.f32 %v117, 0.0
    %v182 = vmax.f32 %v118, 0.0
    %v183 = vmax.f32 %v119, 0.0
    %v184 = vmax.f32 %v120, 0.0
    %v185 = vmax.f32 %v121, 0.0
    %v186 = vmax.f32 %v122, 0.0
    %v187 = vmax.f32 %v123, 0.0
    %v188 = vmax.f32 %v124, 0.0
    %v189 = vmax.f32 %v125, 0.0
    %v190 = vmax.f32 %v126, 0.0
    %v191 = vmax.f32 %v127, 0.0
    %v192 = vmax.f32 %v128, 0.0
    %v193 = vmax.f32 %v129, 0.0
    %v194 = vmax.f32 %v130, 0.0
    %v195 = vmax.f32 %v131, 0.0
    %v196 = vmax.f32 %v132, 0.0
    %v197 = vmax.f32 %v133, 0.0
    %v198 = vmax.f32 %v134, 0.0
    %v199 = vmax.f32 %v135, 0.0
    %v200 = vmax.f32 %v136, 0.0
    %v201 = vmax.f32 %v137, 0.0
    %v202 = vmax.f32 %v138, 0.0
    %v203 = vmax.f32 %v139, 0.0
    %v204 = vmax.f32 %v140, 0.0
    %v205 = vmax.f32 %v141, 0.0
    %v206 = vmax.f32 %v142, 0.0
    %v207 = vmax.f32 %v143, 0.0
    %v208 = vmax.f32 %v144, 0.0
    %v209 = vmax.f32 %v145, 0.0
    %v210 = vmax.f32 %v146, 0.0
    %v211 = vmax.f32 %v147, 0.0
    %v212 = vmax.f32 %v148, 0.0
    %v213 = vmax.f32 %v149, 0.0
    %v214 = vmax.f32 %v150, 0.0
    %v215 = vmax.f32 %v151, 0.0
    %v216 = vmax.f32 %v152, 0.0
    %v217 = vmax.f32 %v153, 0.0
    %v218 = vmax.f32 %v154, 0.0
    %v219 = vmax.f32 %v155, 0.0
    %v220 = vmax.f32 %v156, 0.0
    %v221 = vmax.f32 %v157, 0.0
    %v222 = vmax.f32 %v158, 0.0
    %v223 = vmax.f32 %v159, 0.0
    %v224 = vmax.f32 %v160, 0.0
    %v225 = vmax.f32 %v161, 0.0
    %v226 = vmax.f32 %v162, 0.0
    %v227 = vmax.f32 %v163, 0.0
    %v228 = vmax.f32 %v164, 0.0
    %v229 = vmax.f32 %v165, 0.0
    %v230 = vmax.f32 %v166, 0.0
    %v231 = vmax.f32 %v167, 0.0
    %v232 = vmax.f32 %v168, 0.0
    %v233 = vmax.f32 %v169, 0.0
    %v234 = vmax.f32 %v170, 0.0
    %v235 = vmax.f32 %v171, 0.0
    %v236 = vmax.f32 %v172, 0.0
    %v237 = vmax.f32 %v173, 0.0
    %v238 = vmax.f32 %v174, 0.0
    %v239 = vmax.f32 %v175, 0.0
    %v240 = vmax.f32 %v176, 0.0
    %v241 = vmax.f32 %v177, 0.0
    %v242 = vmax.f32 %v178, 0.0
    %v243 = vmax.f32 %v179, 0.0
    %vm244 = vcmask 126976
    %v245 = vsel %vm244, %v180, 0.0
    %v246 = vsel %vm244, %v181, 0.0
    %v247 = vadd.f32 %v245, %v246
    %v248 = vsel %vm244, %v182, 0.0
    %v249 = vadd.f32 %v247, %v248
    %v250 = vsel %vm244, %v183, 0.0
    %v251 = vadd.f32 %v249, %v250
    %v252 = vsel %vm244, %v184, 0.0
    %v253 = vadd.f32 %v251, %v252
    %v254 = vsel %vm244, %v188, 0.0
    %v255 = vsel %vm244, %v189, 0.0
    %v256 = vadd.f32 %v254, %v255
    %v257 = vsel %vm244, %v190, 0.0
    %v258 = vadd.f32 %v256, %v257
    %v259 = vsel %vm244, %v191, 0.0
    %v260 = vadd.f32 %v258, %v259
    %v261 = vsel %vm244, %v192, 0.0
    %v262 = vadd.f32 %v260, %v261
    %v263 = vsel %vm244, %v196, 0.0
    %v264 = vsel %vm244, %v197, 0.0
    %v265 = vadd.f32 %v263, %v264
    %v266 = vsel %vm244, %v198, 0.0
    %v267 = vadd.f32 %v265, %v266
    %v268 = vsel %vm244, %v199, 0.0
    %v269 = vadd.f32 %v267, %v268
    %v270 = vsel %vm244, %v200, 0.0
    %v271 = vadd.f32 %v269, %v270
    %v272 = vsel %vm244, %v204, 0.0
    %v273 = vsel %vm244, %v205, 0.0
    %v274 = vadd.f32 %v272, %v273
    %v275 = vsel %vm244, %v206, 0.0
    %v276 = vadd.f32 %v274, %v275
    %v277 = vsel %vm244, %v207, 0.0
    %v278 = vadd.f32 %v276, %v277
    %v279 = vsel %vm244, %v208, 0.0
    %v280 = vadd.f32 %v278, %v279
    %v281 = vsel %vm244, %v212, 0.0
    %v282 = vsel %vm244, %v213, 0.0
    %v283 = vadd.f32 %v281, %v282
    %v284 = vsel %vm244, %v214, 0.0
    %v285 = vadd.f32 %v283, %v284
    %v286 = vsel %vm244, %v215, 0.0
    %v287 = vadd.f32 %v285, %v286
    %v288 = vsel %vm244, %v216, 0.0
    %v289 = vadd.f32 %v287, %v288
    %v290 = vsel %vm244, %v220, 0.0
    %v291 = vsel %vm244, %v221, 0.0
    %v292 = vadd.f32 %v290, %v291
    %v293 = vsel %vm244, %v222, 0.0
    %v294 = vadd.f32 %v292, %v293
    %v295 = vsel %vm244, %v223, 0.0
    %v296 = vadd.f32 %v294, %v295
    %v297 = vsel %vm244, %v224, 0.0
    %v298 = vadd.f32 %v296, %v297
    %v299 = vsel %vm244, %v228, 0.0
    %v300 = vsel %vm244, %v229, 0.0
    %v301 = vadd.f32 %v299, %v300
    %v302 = vsel %vm244, %v230, 0.0
    %v303 = vadd.f32 %v301, %v302
    %v304 = vsel %vm244, %v231, 0.0
    %v305 = vadd.f32 %v303, %v304
    %v306 = vsel %vm244, %v232, 0.0
    %v307 = vadd.f32 %v305, %v306
    %v308 = vsel %vm244, %v236, 0.0
    %v309 = vsel %vm244, %v237, 0.0
    %v310 = vadd.f32 %v308, %v309
    %v311 = vsel %vm244, %v238, 0.0
    %v312 = vadd.f32 %v310, %v311
    %v313 = vsel %vm244, %v239, 0.0
    %v314 = vadd.f32 %v312, %v313
    %v315 = vsel %vm244, %v240, 0.0
    %v316 = vadd.f32 %v314, %v315
    %v317 = vsel %vm244, %v253, 0.0
    %v318 = vrot.slane %v317, 4
    %v319 = vadd.f32 %v317, %v318
    %v320 = vrot.slane %v319, 2
    %v321 = vadd.f32 %v319, %v320
    %v322 = vrot.slane %v321, 1
    %v323 = vadd.f32 %v321, %v322
    %v324 = vsel %vm244, %v262, 0.0
    %v325 = vrot.slane %v324, 4
    %v326 = vadd.f32 %v324, %v325
    %v327 = vrot.slane %v326, 2
    %v328 = vadd.f32 %v326, %v327
    %v329 = vrot.slane %v328, 1
    %v330 = vadd.f32 %v328, %v329
    %v331 = vsel %vm244, %v271, 0.0
    %v332 = vrot.slane %v331, 4
    %v333 = vadd.f32 %v331, %v332
    %v334 = vrot.slane %v333, 2
    %v335 = vadd.f32 %v333, %v334
    %v336 = vrot.slane %v335, 1
    %v337 = vadd.f32 %v335, %v336
    %v338 = vsel %vm244, %v280, 0.0
    %v339 = vrot.slane %v338, 4
    %v340 = vadd.f32 %v338, %v339
    %v341 = vrot.slane %v340, 2
    %v342 = vadd.f32 %v340, %v341
    %v343 = vrot.slane %v342, 1
    %v344 = vadd.f32 %v342, %v343
    %v345 = vsel %vm244, %v289, 0.0
    %v346 = vrot.slane %v345, 4
    %v347 = vadd.f32 %v345, %v346
    %v348 = vrot.slane %v347, 2
    %v349 = vadd.f32 %v347, %v348
    %v350 = vrot.slane %v349, 1
    %v351 = vadd.f32 %v349, %v350
    %v352 = vsel %vm244, %v298, 0.0
    %v353 = vrot.slane %v352, 4
    %v354 = vadd.f32 %v352, %v353
    %v355 = vrot.slane %v354, 2
    %v356 = vadd.f32 %v354, %v355
    %v357 = vrot.slane %v356, 1
    %v358 = vadd.f32 %v356, %v357
    %v359 = vsel %vm244, %v307, 0.0
    %v360 = vrot.slane %v359, 4
    %v361 = vadd.f32 %v359, %v360
    %v362 = vrot.slane %v361, 2
    %v363 = vadd.f32 %v361, %v362
    %v364 = vrot.slane %v363, 1
    %v365 = vadd.f32 %v363, %v364
    %v366 = vsel %vm244, %v316, 0.0
    %v367 = vrot.slane %v366, 4
    %v368 = vadd.f32 %v366, %v367
    %v369 = vrot.slane %v368, 2
    %v370 = vadd.f32 %v368, %v369
    %v371 = vrot.slane %v370, 1
    %v372 = vadd.f32 %v370, %v371
    %v373 = vmul.f32 %v323, 0.04
    %v374 = vmul.f32 %v330, 0.04
    %v375 = vmul.f32 %v337, 0.04
    %v376 = vmul.f32 %v344, 0.04
    %v377 = vmul.f32 %v351, 0.04
    %v378 = vmul.f32 %v358, 0.04
    %v379 = vmul.f32 %v365, 0.04
    %v380 = vmul.f32 %v372, 0.04
    %vm381 = vcmask 130051
    %v382 = vsel %vm381, %v180, 0.0
    %v383 = vsel %vm381, %v181, 0.0
    %v384 = vadd.f32 %v382, %v383
    %v385 = vsel %vm381, %v182, 0.0
    %v386 = vadd.f32 %v384, %v385
    %v387 = vsel %vm381, %v183, 0.0
    %v388 = vadd.f32 %v386, %v387
    %v389 = vsel %vm381, %v184, 0.0
    %v390 = vadd.f32 %v388, %v389
    %v391 = vsel %vm381, %v188, 0.0
    %v392 = vsel %vm381, %v189, 0.0
    %v393 = vadd.f32 %v391, %v392
    %v394 = vsel %vm381, %v190, 0.0
    %v395 = vadd.f32 %v393, %v394
    %v396 = vsel %vm381, %v191, 0.0
    %v397 = vadd.f32 %v395, %v396
    %v398 = vsel %vm381, %v192, 0.0
    %v399 = vadd.f32 %v397, %v398
    %v400 = vsel %vm381, %v196, 0.0
    %v401 = vsel %vm381, %v197, 0.0
    %v402 = vadd.f32 %v400, %v401
    %v403 = vsel %vm381, %v198, 0.0
    %v404 = vadd.f32 %v402, %v403
    %v405 = vsel %vm381, %v199, 0.0
    %v406 = vadd.f32 %v404, %v405
    %v407 = vsel %vm381, %v200, 0.0
    %v408 = vadd.f32 %v406, %v407
    %v409 = vsel %vm381, %v204, 0.0
    %v410 = vsel %vm381, %v205, 0.0
    %v411 = vadd.f32 %v409, %v410
    %v412 = vsel %vm381, %v206, 0.0
    %v413 = vadd.f32 %v411, %v412
    %v414 = vsel %vm381, %v207, 0.0
    %v415 = vadd.f32 %v413, %v414
    %v416 = vsel %vm381, %v208, 0.0
    %v417 = vadd.f32 %v415, %v416
    %v418 = vsel %vm381, %v212, 0.0
    %v419 = vsel %vm381, %v213, 0.0
    %v420 = vadd.f32 %v418, %v419
    %v421 = vsel %vm381, %v214, 0.0
    %v422 = vadd.f32 %v420, %v421
    %v423 = vsel %vm381, %v215, 0.0
    %v424 = vadd.f32 %v422, %v423
    %v425 = vsel %vm381, %v216, 0.0
    %v426 = vadd.f32 %v424, %v425
    %v427 = vsel %vm381, %v220, 0.0
    %v428 = vsel %vm381, %v221, 0.0
    %v429 = vadd.f32 %v427, %v428
    %v430 = vsel %vm381, %v222, 0.0
    %v431 = vadd.f32 %v429, %v430
    %v432 = vsel %vm381, %v223, 0.0
    %v433 = vadd.f32 %v431, %v432
    %v434 = vsel %vm381, %v224, 0.0
    %v435 = vadd.f32 %v433, %v434
    %v436 = vsel %vm381, %v228, 0.0
    %v437 = vsel %vm381, %v229, 0.0
    %v438 = vadd.f32 %v436, %v437
    %v439 = vsel %vm381, %v230, 0.0
    %v440 = vadd.f32 %v438, %v439
    %v441 = vsel %vm381, %v231, 0.0
    %v442 = vadd.f32 %v440, %v441
    %v443 = vsel %vm381, %v232, 0.0
    %v444 = vadd.f32 %v442, %v443
    %v445 = vsel %vm381, %v236, 0.0
    %v446 = vsel %vm381, %v237, 0.0
    %v447 = vadd.f32 %v445, %v446
    %v448 = vsel %vm381, %v238, 0.0
    %v449 = vadd.f32 %v447, %v448
    %v450 = vsel %vm381, %v239, 0.0
    %v451 = vadd.f32 %v449, %v450
    %v452 = vsel %vm381, %v240, 0.0
    %v453 = vadd.f32 %v451, %v452
    %v462 = vrot.slane %v390, 3
    %v463 = vrot.slane %v399, 3
    %v464 = vrot.slane %v408, 3
    %v465 = vrot.slane %v417, 3
    %v466 = vrot.slane %v426, 3
    %v467 = vrot.slane %v435, 3
    %v468 = vrot.slane %v444, 3
    %v469 = vrot.slane %v453, 3
    %v478 = vsel %vm244, %v462, 0.0
    %v479 = vrot.slane %v478, 4
    %v480 = vadd.f32 %v478, %v479
    %v481 = vrot.slane %v480, 2
    %v482 = vadd.f32 %v480, %v481
    %v483 = vrot.slane %v482, 1
    %v484 = vadd.f32 %v482, %v483
    %v485 = vsel %vm244, %v463, 0.0
    %v486 = vrot.slane %v485, 4
    %v487 = vadd.f32 %v485, %v486
    %v488 = vrot.slane %v487, 2
    %v489 = vadd.f32 %v487, %v488
    %v490 = vrot.slane %v489, 1
    %v491 = vadd.f32 %v489, %v490
    %v492 = vsel %vm244, %v464, 0.0
    %v493 = vrot.slane %v492, 4
    %v494 = vadd.f32 %v492, %v493
    %v495 = vrot.slane %v494, 2
    %v496 = vadd.f32 %v494, %v495
    %v497 = vrot.slane %v496, 1
    %v498 = vadd.f32 %v496, %v497
    %v499 = vsel %vm244, %v465, 0.0
    %v500 = vrot.slane %v499, 4
    %v501 = vadd.f32 %v499, %v500
    %v502 = vrot.slane %v501, 2
    %v503 = vadd.f32 %v501, %v502
    %v504 = vrot.slane %v503, 1
    %v505 = vadd.f32 %v503, %v504
    %v506 = vsel %vm244, %v466, 0.0
    %v507 = vrot.slane %v506, 4
    %v508 = vadd.f32 %v506, %v507
    %v509 = vrot.slane %v508, 2
    %v510 = vadd.f32 %v508, %v509
    %v511 = vrot.slane %v510, 1
    %v512 = vadd.f32 %v510, %v511
    %v513 = vsel %vm244, %v467, 0.0
    %v514 = vrot.slane %v513, 4
    %v515 = vadd.f32 %v513, %v514
    %v516 = vrot.slane %v515, 2
    %v517 = vadd.f32 %v515, %v516
    %v518 = vrot.slane %v517, 1
    %v519 = vadd.f32 %v517, %v518
    %v520 = vsel %vm244, %v468, 0.0
    %v521 = vrot.slane %v520, 4
    %v522 = vadd.f32 %v520, %v521
    %v523 = vrot.slane %v522, 2
    %v524 = vadd.f32 %v522, %v523
    %v525 = vrot.slane %v524, 1
    %v526 = vadd.f32 %v524, %v525
    %v527 = vsel %vm244, %v469, 0.0
    %v528 = vrot.slane %v527, 4
    %v529 = vadd.f32 %v527, %v528
    %v530 = vrot.slane %v529, 2
    %v531 = vadd.f32 %v529, %v530
    %v532 = vrot.slane %v531, 1
    %v533 = vadd.f32 %v531, %v532
    %v534 = vmul.f32 %v484, 0.04
    %v535 = vmul.f32 %v491, 0.04
    %v536 = vmul.f32 %v498, 0.04
    %v537 = vmul.f32 %v505, 0.04
    %v538 = vmul.f32 %v512, 0.04
    %v539 = vmul.f32 %v519, 0.04
    %v540 = vmul.f32 %v526, 0.04
    %v541 = vmul.f32 %v533, 0.04
    %v542 = vadd.f32 %v250, %v252
    %v543 = vsel %vm244, %v185, 0.0
    %v544 = vadd.f32 %v542, %v543
    %v545 = vsel %vm244, %v186, 0.0
    %v546 = vadd.f32 %v544, %v545
    %v547 = vsel %vm244, %v187, 0.0
    %v548 = vadd.f32 %v546, %v547
    %v549 = vadd.f32 %v259, %v261
    %v550 = vsel %vm244, %v193, 0.0
    %v551 = vadd.f32 %v549, %v550
    %v552 = vsel %vm244, %v194, 0.0
    %v553 = vadd.f32 %v551, %v552
    %v554 = vsel %vm244, %v195, 0.0
    %v555 = vadd.f32 %v553, %v554
    %v556 = vadd.f32 %v268, %v270
    %v557 = vsel %vm244, %v201, 0.0
    %v558 = vadd.f32 %v556, %v557
    %v559 = vsel %vm244, %v202, 0.0
    %v560 = vadd.f32 %v558, %v559
    %v561 = vsel %vm244, %v203, 0.0
    %v562 = vadd.f32 %v560, %v561
    %v563 = vadd.f32 %v277, %v279
    %v564 = vsel %vm244, %v209, 0.0
    %v565 = vadd.f32 %v563, %v564
    %v566 = vsel %vm244, %v210, 0.0
    %v567 = vadd.f32 %v565, %v566
    %v568 = vsel %vm244, %v211, 0.0
    %v569 = vadd.f32 %v567, %v568
    %v570 = vadd.f32 %v286, %v288
    %v571 = vsel %vm244, %v217, 0.0
    %v572 = vadd.f32 %v570, %v571
    %v573 = vsel %vm244, %v218, 0.0
    %v574 = vadd.f32 %v572, %v573
    %v575 = vsel %vm244, %v219, 0.0
    %v576 = vadd.f32 %v574, %v575
    %v577 = vadd.f32 %v295, %v297
    %v578 = vsel %vm244, %v225, 0.0
    %v579 = vadd.f32 %v577, %v578
    %v580 = vsel %vm244, %v226, 0.0
    %v581 = vadd.f32 %v579, %v580
    %v582 = vsel %vm244, %v227, 0.0
    %v583 = vadd.f32 %v581, %v582
    %v584 = vadd.f32 %v304, %v306
    %v585 = vsel %vm244, %v233, 0.0
    %v586 = vadd.f32 %v584, %v585
    %v587 = vsel %vm244, %v234, 0.0
    %v588 = vadd.f32 %v586, %v587
    %v589 = vsel %vm244, %v235, 0.0
    %v590 = vadd.f32 %v588, %v589
    %v591 = vadd.f32 %v313, %v315
    %v592 = vsel %vm244, %v241, 0.0
    %v593 = vadd.f32 %v591, %v592
    %v594 = vsel %vm244, %v242, 0.0
    %v595 = vadd.f32 %v593, %v594
    %v596 = vsel %vm244, %v243, 0.0
    %v597 = vadd.f32 %v595, %v596
    %v598 = vsel %vm244, %v548, 0.0
    %v599 = vrot.slane %v598, 4
    %v600 = vadd.f32 %v598, %v599
    %v601 = vrot.slane %v600, 2
    %v602 = vadd.f32 %v600, %v601
    %v603 = vrot.slane %v602, 1
    %v604 = vadd.f32 %v602, %v603
    %v605 = vsel %vm244, %v555, 0.0
    %v606 = vrot.slane %v605, 4
    %v607 = vadd.f32 %v605, %v606
    %v608 = vrot.slane %v607, 2
    %v609 = vadd.f32 %v607, %v608
    %v610 = vrot.slane %v609, 1
    %v611 = vadd.f32 %v609, %v610
    %v612 = vsel %vm244, %v562, 0.0
    %v613 = vrot.slane %v612, 4
    %v614 = vadd.f32 %v612, %v613
    %v615 = vrot.slane %v614, 2
    %v616 = vadd.f32 %v614, %v615
    %v617 = vrot.slane %v616, 1
    %v618 = vadd.f32 %v616, %v617
    %v619 = vsel %vm244, %v569, 0.0
    %v620 = vrot.slane %v619, 4
    %v621 = vadd.f32 %v619, %v620
    %v622 = vrot.slane %v621, 2
    %v623 = vadd.f32 %v621, %v622
    %v624 = vrot.slane %v623, 1
    %v625 = vadd.f32 %v623, %v624
    %v626 = vsel %vm244, %v576, 0.0
    %v627 = vrot.slane %v626, 4
    %v628 = vadd.f32 %v626, %v627
    %v629 = vrot.slane %v628, 2
    %v630 = vadd.f32 %v628, %v629
    %v631 = vrot.slane %v630, 1
    %v632 = vadd.f32 %v630, %v631
    %v633 = vsel %vm244, %v583, 0.0
    %v634 = vrot.slane %v633, 4
    %v635 = vadd.f32 %v633, %v634
    %v636 = vrot.slane %v635, 2
    %v637 = vadd.f32 %v635, %v636
    %v638 = vrot.slane %v637, 1
    %v639 = vadd.f32 %v637, %v638
    %v640 = vsel %vm244, %v590, 0.0
    %v641 = vrot.slane %v640, 4
    %v642 = vadd.f32 %v640, %v641
    %v643 = vrot.slane %v642, 2
    %v644 = vadd.f32 %v642, %v643
    %v645 = vrot.slane %v644, 1
    %v646 = vadd.f32 %v644, %v645
    %v647 = vsel %vm244, %v597, 0.0
    %v648 = vrot.slane %v647, 4
    %v649 = vadd.f32 %v647, %v648
    %v650 = vrot.slane %v649, 2
    %v651 = vadd.f32 %v649, %v650
    %v652 = vrot.slane %v651, 1
    %v653 = vadd.f32 %v651, %v652
    %v654 = vmul.f32 %v604, 0.04
    %v655 = vmul.f32 %v611, 0.04
    %v656 = vmul.f32 %v618, 0.04
    %v657 = vmul.f32 %v625, 0.04
    %v658 = vmul.f32 %v632, 0.04
    %v659 = vmul.f32 %v639, 0.04
    %v660 = vmul.f32 %v646, 0.04
    %v661 = vmul.f32 %v653, 0.04
    %v662 = vadd.f32 %v387, %v389
    %v663 = vsel %vm381, %v185, 0.0
    %v664 = vadd.f32 %v662, %v663
    %v665 = vsel %vm381, %v186, 0.0
    %v666 = vadd.f32 %v664, %v665
    %v667 = vsel %vm381, %v187, 0.0
    %v668 = vadd.f32 %v666, %v667
    %v669 = vadd.f32 %v396, %v398
    %v670 = vsel %vm381, %v193, 0.0
    %v671 = vadd.f32 %v669, %v670
    %v672 = vsel %vm381, %v194, 0.0
    %v673 = vadd.f32 %v671, %v672
    %v674 = vsel %vm381, %v195, 0.0
    %v675 = vadd.f32 %v673, %v674
    %v676 = vadd.f32 %v405, %v407
    %v677 = vsel %vm381, %v201, 0.0
    %v678 = vadd.f32 %v676, %v677
    %v679 = vsel %vm381, %v202, 0.0
    %v680 = vadd.f32 %v678, %v679
    %v681 = vsel %vm381, %v203, 0.0
    %v682 = vadd.f32 %v680, %v681
    %v683 = vadd.f32 %v414, %v416
    %v684 = vsel %vm381, %v209, 0.0
    %v685 = vadd.f32 %v683, %v684
    %v686 = vsel %vm381, %v210, 0.0
    %v687 = vadd.f32 %v685, %v686
    %v688 = vsel %vm381, %v211, 0.0
    %v689 = vadd.f32 %v687, %v688
    %v690 = vadd.f32 %v423, %v425
    %v691 = vsel %vm381, %v217, 0.0
    %v692 = vadd.f32 %v690, %v691
    %v693 = vsel %vm381, %v218, 0.0
    %v694 = vadd.f32 %v692, %v693
    %v695 = vsel %vm381, %v219, 0.0
    %v696 = vadd.f32 %v694, %v695
    %v697 = vadd.f32 %v432, %v434
    %v698 = vsel %vm381, %v225, 0.0
    %v699 = vadd.f32 %v697, %v698
    %v700 = vsel %vm381, %v226, 0.0
    %v701 = vadd.f32 %v699, %v700
    %v702 = vsel %vm381, %v227, 0.0
    %v703 = vadd.f32 %v701, %v702
    %v704 = vadd.f32 %v441, %v443
    %v705 = vsel %vm381, %v233, 0.0
    %v706 = vadd.f32 %v704, %v705
    %v707 = vsel %vm381, %v234, 0.0
    %v708 = vadd.f32 %v706, %v707
    %v709 = vsel %vm381, %v235, 0.0
    %v710 = vadd.f32 %v708, %v709
    %v711 = vadd.f32 %v450, %v452
    %v712 = vsel %vm381, %v241, 0.0
    %v713 = vadd.f32 %v711, %v712
    %v714 = vsel %vm381, %v242, 0.0
    %v715 = vadd.f32 %v713, %v714
    %v716 = vsel %vm381, %v243, 0.0
    %v717 = vadd.f32 %v715, %v716
    %v726 = vrot.slane %v668, 3
    %v727 = vrot.slane %v675, 3
    %v728 = vrot.slane %v682, 3
    %v729 = vrot.slane %v689, 3
    %v730 = vrot.slane %v696, 3
    %v731 = vrot.slane %v703, 3
    %v732 = vrot.slane %v710, 3
    %v733 = vrot.slane %v717, 3
    %v742 = vsel %vm244, %v726, 0.0
    %v743 = vrot.slane %v742, 4
    %v744 = vadd.f32 %v742, %v743
    %v745 = vrot.slane %v744, 2
    %v746 = vadd.f32 %v744, %v745
    %v747 = vrot.slane %v746, 1
    %v748 = vadd.f32 %v746, %v747
    %v749 = vsel %vm244, %v727, 0.0
    %v750 = vrot.slane %v749, 4
    %v751 = vadd.f32 %v749, %v750
    %v752 = vrot.slane %v751, 2
    %v753 = vadd.f32 %v751, %v752
    %v754 = vrot.slane %v753, 1
    %v755 = vadd.f32 %v753, %v754
    %v756 = vsel %vm244, %v728, 0.0
    %v757 = vrot.slane %v756, 4
    %v758 = vadd.f32 %v756, %v757
    %v759 = vrot.slane %v758, 2
    %v760 = vadd.f32 %v758, %v759
    %v761 = vrot.slane %v760, 1
    %v762 = vadd.f32 %v760, %v761
    %v763 = vsel %vm244, %v729, 0.0
    %v764 = vrot.slane %v763, 4
    %v765 = vadd.f32 %v763, %v764
    %v766 = vrot.slane %v765, 2
    %v767 = vadd.f32 %v765, %v766
    %v768 = vrot.slane %v767, 1
    %v769 = vadd.f32 %v767, %v768
    %v770 = vsel %vm244, %v730, 0.0
    %v771 = vrot.slane %v770, 4
    %v772 = vadd.f32 %v770, %v771
    %v773 = vrot.slane %v772, 2
    %v774 = vadd.f32 %v772, %v773
    %v775 = vrot.slane %v774, 1
    %v776 = vadd.f32 %v774, %v775
    %v777 = vsel %vm244, %v731, 0.0
    %v778 = vrot.slane %v777, 4
    %v779 = vadd.f32 %v777, %v778
    %v780 = vrot.slane %v779, 2
    %v781 = vadd.f32 %v779, %v780
    %v782 = vrot.slane %v781, 1
    %v783 = vadd.f32 %v781, %v782
    %v784 = vsel %vm244, %v732, 0.0
    %v785 = vrot.slane %v784, 4
    %v786 = vadd.f32 %v784, %v785
    %v787 = vrot.slane %v786, 2
    %v788 = vadd.f32 %v786, %v787
    %v789 = vrot.slane %v788, 1
    %v790 = vadd.f32 %v788, %v789
    %v791 = vsel %vm244, %v733, 0.0
    %v792 = vrot.slane %v791, 4
    %v793 = vadd.f32 %v791, %v792
    %v794 = vrot.slane %v793, 2
    %v795 = vadd.f32 %v793, %v794
    %v796 = vrot.slane %v795, 1
    %v797 = vadd.f32 %v795, %v796
    %v798 = vmul.f32 %v748, 0.04
    %v799 = vmul.f32 %v755, 0.04
    %v800 = vmul.f32 %v762, 0.04
    %v801 = vmul.f32 %v769, 0.04
    %v802 = vmul.f32 %v776, 0.04
    %v803 = vmul.f32 %v783, 0.04
    %v804 = vmul.f32 %v790, 0.04
    %v805 = vmul.f32 %v797, 0.04
    %vm814 = vcmask 1041409
    %v815 = vsel %vm814, %v374, %v373
    %vm816 = vcmask 1042434
    %v817 = vsel %vm816, %v375, %v815
    %vm818 = vcmask 1043459
    %v819 = vsel %vm818, %v376, %v817
    %vm820 = vcmask 1044484
    %v821 = vsel %vm820, %v377, %v819
    %vm822 = vcmask 1045509
    %v823 = vsel %vm822, %v378, %v821
    %vm824 = vcmask 1046534
    %v825 = vsel %vm824, %v379, %v823
    %vm826 = vcmask 1047559
    %v827 = vsel %vm826, %v380, %v825
    %v836 = vsel %vm814, %v535, %v534
    %v837 = vsel %vm816, %v536, %v836
    %v838 = vsel %vm818, %v537, %v837
    %v839 = vsel %vm820, %v538, %v838
    %v840 = vsel %vm822, %v539, %v839
    %v841 = vsel %vm824, %v540, %v840
    %v842 = vsel %vm826, %v541, %v841
    %v851 = vsel %vm814, %v655, %v654
    %v852 = vsel %vm816, %v656, %v851
    %v853 = vsel %vm818, %v657, %v852
    %v854 = vsel %vm820, %v658, %v853
    %v855 = vsel %vm822, %v659, %v854
    %v856 = vsel %vm824, %v660, %v855
    %v857 = vsel %vm826, %v661, %v856
    %v866 = vsel %vm814, %v799, %v798
    %v867 = vsel %vm816, %v800, %v866
    %v868 = vsel %vm818, %v801, %v867
    %v869 = vsel %vm820, %v802, %v868
    %v870 = vsel %vm822, %v803, %v869
    %v871 = vsel %vm824, %v804, %v870
    %v872 = vsel %vm826, %v805, %v871
    %v873 = vld [vmem:[#allocation5] sm:$0xff]
    %v874 = vld [vmem:[#allocation5 + $0x8] sm:$0xff]
    %v875 = vld [vmem:[#allocation7] sm:$0x1]
    %v877 = vlaneseq
    %v878 = vshrl.u32 %v877, 7
    %v879 = vsub.s32 0, %v878
    %v880 = vrot.slane %v875, %v879
    %vm882 = vcmask 130048
    %v883 = vsel %vm882, %v827, 0
    %v885 = vsel %vm882, %v842, 0
    %v887 = vsel %vm882, %v857, 0
    %v889 = vsel %vm882, %v872, 0
    %891 = vmatprep.subr.mxu0 0.0
    %892 = vmatpush1.msra.mxu0 %v873
    %893 = vmatprep.subr.mxu0 0.0
    %894 = vmatpush1.msra.mxu0 %v874
    %895 = vmatprep.subr.mxu0 0.0
    %896 = vmatpush1.msra.mxu0 0.0
    %897 = vmatprep.subr.mxu0 0.0
    %898 = vmatpush1.msra.mxu0 0.0
    %899 = vmatprep.subr.mxu0 0.0
    %900 = vmatpush1.msra.mxu0 0.0
    %901 = vmatprep.subr.mxu0 0.0
    %902 = vmatpush1.msra.mxu0 0.0
    %903 = vmatprep.subr.mxu0 0.0
    %904 = vmatpush1.msra.mxu0 0.0
    %905 = vmatprep.subr.mxu0 0.0
    %906 = vmatpush1.msra.mxu0 0.0
    %907 = vmatprep.subr.mxu0 0.0
    %908 = vmatpush1.msra.mxu0 0.0
    %909 = vmatprep.subr.mxu0 0.0
    %910 = vmatpush1.msra.mxu0 0.0
    %911 = vmatprep.subr.mxu0 0.0
    %912 = vmatpush1.msra.mxu0 0.0
    %913 = vmatprep.subr.mxu0 0.0
    %914 = vmatpush1.msra.mxu0 0.0
    %915 = vmatprep.subr.mxu0 0.0
    %916 = vmatpush1.msra.mxu0 0.0
    %917 = vmatprep.subr.mxu0 0.0
    %918 = vmatpush1.msra.mxu0 0.0
    %919 = vmatprep.subr.mxu0 0.0
    %920 = vmatpush1.msra.mxu0 0.0
    %921 = vmatprep.subr.mxu0 0.0
    %922 = vmatpush1.msra.mxu0 0.0
    %923 = vmatprep.subr.mxu0 0.0
    %924 = vmatpush1.msra.mxu0 0.0
    %925 = vmatprep.subr.mxu0 0.0
    %926 = vmatpush1.msra.mxu0 0.0
    %927 = vmatprep.subr.mxu0 0.0
    %928 = vmatpush1.msra.mxu0 0.0
    %929 = vmatprep.subr.mxu0 0.0
    %930 = vmatpush1.msra.mxu0 0.0
    %931 = vmatprep.subr.mxu0 0.0
    %932 = vmatpush1.msra.mxu0 0.0
    %933 = vmatprep.subr.mxu0 0.0
    %934 = vmatpush1.msra.mxu0 0.0
    %935 = vmatprep.subr.mxu0 0.0
    %936 = vmatpush1.msra.mxu0 0.0
    %937 = vmatprep.subr.mxu0 0.0
    %938 = vmatpush1.msra.mxu0 0.0
    %939 = vmatprep.subr.mxu0 0.0
    %940 = vmatpush1.msra.mxu0 0.0
    %941 = vmatprep.subr.mxu0 0.0
    %942 = vmatpush1.msra.mxu0 0.0
    %943 = vmatprep.subr.mxu0 0.0
    %944 = vmatpush1.msra.mxu0 0.0
    %945 = vmatprep.subr.mxu0 0.0
    %946 = vmatpush1.msra.mxu0 0.0
    %947 = vmatprep.subr.mxu0 0.0
    %948 = vmatpush1.msra.mxu0 0.0
    %949 = vmatprep.subr.mxu0 0.0
    %950 = vmatpush1.msra.mxu0 0.0
    %951 = vmatprep.subr.mxu0 0.0
    %952 = vmatpush1.msra.mxu0 0.0
    %953 = vmatprep.subr.mxu0 0.0
    %954 = vmatpush1.msra.mxu0 0.0
    %955 = vmatprep.mubr.f32.mxu0 0.0
    %956 = vmatmul.mubr.f32.gmra.mrb[0].mxu0 %v883
    %v957 = vpop.f32.mrb[0].mxu0
    %v958 = vadd.f32 %v880, %v957
    %v959 = vpop.f32.mrb[0].mxu0
    %960 = vmatprep.mubr.f32.mxu0 0.0
    %961 = vmatmul.mubr.f32.gmra.mrb[0].mxu0 %v885
    %v962 = vpop.f32.mrb[0].mxu0
    %v963 = vadd.f32 %v880, %v962
    %v964 = vpop.f32.mrb[0].mxu0
    %965 = vmatprep.mubr.f32.mxu0 0.0
    %966 = vmatmul.mubr.f32.gmra.mrb[0].mxu0 %v887
    %v967 = vpop.f32.mrb[0].mxu0
    %v968 = vadd.f32 %v880, %v967
    %v969 = vpop.f32.mrb[0].mxu0
    %970 = vmatprep.mubr.f32.mxu0 0.0
    %971 = vmatmul.mubr.f32.gmra.mrb[0].mxu0 %v889
    %v972 = vpop.f32.mrb[0].mxu0
    %v973 = vadd.f32 %v880, %v972
    %v974 = vpop.f32.mrb[0].mxu0
    %975 = vdwg.mxu0
    %v976 = vmax.f32 %v958, 0.0
    %v977 = vmax.f32 %v963, 0.0
    %v978 = vmax.f32 %v968, 0.0
    %v979 = vmax.f32 %v973, 0.0
    %v980 = vld [vmem:[#allocation8] sm:$0xff]
    %v981 = vld [vmem:[#allocation8 + $0x8] sm:$0xff]
    %v982 = vld [vmem:[#allocation8 + $0x10] sm:$0xff]
    %v983 = vld [vmem:[#allocation8 + $0x18] sm:$0xff]
    %v984 = vld [vmem:[#allocation8 + $0x20] sm:$0xff]
    %v985 = vld [vmem:[#allocation8 + $0x28] sm:$0xff]
    %v986 = vld [vmem:[#allocation8 + $0x30] sm:$0xff]
    %v987 = vld [vmem:[#allocation8 + $0x38] sm:$0xff]
    %v988 = vld [vmem:[#allocation8 + $0x40] sm:$0xff]
    %v989 = vld [vmem:[#allocation8 + $0x48] sm:$0xff]
    %v990 = vld [vmem:[#allocation8 + $0x50] sm:$0xff]
    %v991 = vld [vmem:[#allocation8 + $0x58] sm:$0xff]
    %v992 = vld [vmem:[#allocation8 + $0x60] sm:$0xff]
    %v993 = vld [vmem:[#allocation8 + $0x68] sm:$0xff]
    %v994 = vld [vmem:[#allocation8 + $0x70] sm:$0xff]
    %v995 = vld [vmem:[#allocation8 + $0x78] sm:$0xff]
    %v996 = vld [vmem:[#allocation8 + $0x80] sm:$0xff]
    %v997 = vld [vmem:[#allocation8 + $0x88] sm:$0xff]
    %v998 = vld [vmem:[#allocation8 + $0x90] sm:$0xff]
    %v999 = vld [vmem:[#allocation8 + $0x98] sm:$0xff]
    %v1000 = vld [vmem:[#allocation8 + $0xa0] sm:$0xff]
    %v1001 = vld [vmem:[#allocation8 + $0xa8] sm:$0xff]
    %v1002 = vld [vmem:[#allocation8 + $0xb0] sm:$0xff]
    %v1003 = vld [vmem:[#allocation8 + $0xb8] sm:$0xff]
    %v1004 = vld [vmem:[#allocation8 + $0xc0] sm:$0xff]
    %v1005 = vld [vmem:[#allocation8 + $0xc8] sm:$0xff]
    %v1006 = vld [vmem:[#allocation8 + $0xd0] sm:$0xff]
    %v1007 = vld [vmem:[#allocation8 + $0xd8] sm:$0xff]
    %v1008 = vld [vmem:[#allocation8 + $0xe0] sm:$0xff]
    %v1009 = vld [vmem:[#allocation8 + $0xe8] sm:$0xff]
    %v1010 = vld [vmem:[#allocation8 + $0xf0] sm:$0xff]
    %v1011 = vld [vmem:[#allocation8 + $0xf8] sm:$0xff]
    %v1012 = vld [vmem:[#allocation8 + $0x100] sm:$0xff]
    %v1013 = vld [vmem:[#allocation8 + $0x108] sm:$0xff]
    %v1014 = vld [vmem:[#allocation8 + $0x110] sm:$0xff]
    %v1015 = vld [vmem:[#allocation8 + $0x118] sm:$0xff]
    %v1016 = vld [vmem:[#allocation8 + $0x120] sm:$0xff]
    %v1017 = vld [vmem:[#allocation8 + $0x128] sm:$0xff]
    %v1018 = vld [vmem:[#allocation8 + $0x130] sm:$0xff]
    %v1019 = vld [vmem:[#allocation8 + $0x138] sm:$0xff]
    %v1020 = vld [vmem:[#allocation8 + $0x140] sm:$0xff]
    %v1021 = vld [vmem:[#allocation8 + $0x148] sm:$0xff]
    %v1022 = vld [vmem:[#allocation8 + $0x150] sm:$0xff]
    %v1023 = vld [vmem:[#allocation8 + $0x158] sm:$0xff]
    %v1024 = vld [vmem:[#allocation8 + $0x160] sm:$0xff]
    %v1025 = vld [vmem:[#allocation8 + $0x168] sm:$0xff]
    %v1026 = vld [vmem:[#allocation8 + $0x170] sm:$0xff]
    %v1027 = vld [vmem:[#allocation8 + $0x178] sm:$0xff]
    %v1028 = vld [vmem:[#allocation8 + $0x180] sm:$0xff]
    %v1029 = vld [vmem:[#allocation8 + $0x188] sm:$0xff]
    %v1030 = vld [vmem:[#allocation8 + $0x190] sm:$0xff]
    %v1031 = vld [vmem:[#allocation8 + $0x198] sm:$0xff]
    %v1032 = vld [vmem:[#allocation8 + $0x1a0] sm:$0xff]
    %v1033 = vld [vmem:[#allocation8 + $0x1a8] sm:$0xff]
    %v1034 = vld [vmem:[#allocation8 + $0x1b0] sm:$0xff]
    %v1035 = vld [vmem:[#allocation8 + $0x1b8] sm:$0xff]
    %v1036 = vld [vmem:[#allocation8 + $0x1c0] sm:$0xff]
    %v1037 = vld [vmem:[#allocation8 + $0x1c8] sm:$0xff]
    %v1038 = vld [vmem:[#allocation8 + $0x1d0] sm:$0xff]
    %v1039 = vld [vmem:[#allocation8 + $0x1d8] sm:$0xff]
    %v1040 = vld [vmem:[#allocation8 + $0x1e0] sm:$0xff]
    %v1041 = vld [vmem:[#allocation8 + $0x1e8] sm:$0xff]
    %v1042 = vld [vmem:[#allocation8 + $0x1f0] sm:$0xff]
    %v1043 = vld [vmem:[#allocation8 + $0x1f8] sm:$0xff]
    %v1044 = vld [vmem:[#allocation8 + $0x200] sm:$0xff]
    %v1045 = vld [vmem:[#allocation8 + $0x208] sm:$0xff]
    %v1046 = vld [vmem:[#allocation8 + $0x210] sm:$0xff]
    %v1047 = vld [vmem:[#allocation8 + $0x218] sm:$0xff]
    %v1048 = vld [vmem:[#allocation8 + $0x220] sm:$0xff]
    %v1049 = vld [vmem:[#allocation8 + $0x228] sm:$0xff]
    %v1050 = vld [vmem:[#allocation8 + $0x230] sm:$0xff]
    %v1051 = vld [vmem:[#allocation8 + $0x238] sm:$0xff]
    %v1052 = vld [vmem:[#allocation8 + $0x240] sm:$0xff]
    %v1053 = vld [vmem:[#allocation8 + $0x248] sm:$0xff]
    %v1054 = vld [vmem:[#allocation8 + $0x250] sm:$0xff]
    %v1055 = vld [vmem:[#allocation8 + $0x258] sm:$0xff]
    %v1056 = vld [vmem:[#allocation8 + $0x260] sm:$0xff]
    %v1057 = vld [vmem:[#allocation8 + $0x268] sm:$0xff]
    %v1058 = vld [vmem:[#allocation8 + $0x270] sm:$0xff]
    %v1059 = vld [vmem:[#allocation8 + $0x278] sm:$0xff]
    %v1060 = vld [vmem:[#allocation8 + $0x280] sm:$0xff]
    %v1061 = vld [vmem:[#allocation8 + $0x288] sm:$0xff]
    %v1062 = vld [vmem:[#allocation8 + $0x290] sm:$0xff]
    %v1063 = vld [vmem:[#allocation8 + $0x298] sm:$0xff]
    %v1064 = vld [vmem:[#allocation8 + $0x2a0] sm:$0xff]
    %v1065 = vld [vmem:[#allocation8 + $0x2a8] sm:$0xff]
    %v1066 = vld [vmem:[#allocation8 + $0x2b0] sm:$0xff]
    %v1067 = vld [vmem:[#allocation8 + $0x2b8] sm:$0xff]
    %v1068 = vld [vmem:[#allocation8 + $0x2c0] sm:$0xff]
    %v1069 = vld [vmem:[#allocation8 + $0x2c8] sm:$0xff]
    %v1070 = vld [vmem:[#allocation8 + $0x2d0] sm:$0xff]
    %v1071 = vld [vmem:[#allocation8 + $0x2d8] sm:$0xff]
    %v1072 = vld [vmem:[#allocation8 + $0x2e0] sm:$0xff]
    %v1073 = vld [vmem:[#allocation8 + $0x2e8] sm:$0xff]
    %v1074 = vld [vmem:[#allocation8 + $0x2f0] sm:$0xff]
    %v1075 = vld [vmem:[#allocation8 + $0x2f8] sm:$0xff]
    %v1076 = vld [vmem:[#allocation8 + $0x300] sm:$0xff]
    %v1077 = vld [vmem:[#allocation8 + $0x308] sm:$0xff]
    %v1078 = vld [vmem:[#allocation8 + $0x310] sm:$0xff]
    %v1079 = vld [vmem:[#allocation8 + $0x318] sm:$0xff]
    %v1080 = vld [vmem:[#allocation8 + $0x320] sm:$0xff]
    %v1081 = vld [vmem:[#allocation8 + $0x328] sm:$0xff]
    %v1082 = vld [vmem:[#allocation8 + $0x330] sm:$0xff]
    %v1083 = vld [vmem:[#allocation8 + $0x338] sm:$0xff]
    %v1084 = vld [vmem:[#allocation8 + $0x340] sm:$0xff]
    %v1085 = vld [vmem:[#allocation8 + $0x348] sm:$0xff]
    %v1086 = vld [vmem:[#allocation8 + $0x350] sm:$0xff]
    %v1087 = vld [vmem:[#allocation8 + $0x358] sm:$0xff]
    %v1088 = vld [vmem:[#allocation8 + $0x360] sm:$0xff]
    %v1089 = vld [vmem:[#allocation8 + $0x368] sm:$0xff]
    %v1090 = vld [vmem:[#allocation8 + $0x370] sm:$0xff]
    %v1091 = vld [vmem:[#allocation8 + $0x378] sm:$0xff]
    %v1092 = vld [vmem:[#allocation8 + $0x380] sm:$0xff]
    %v1093 = vld [vmem:[#allocation8 + $0x388] sm:$0xff]
    %v1094 = vld [vmem:[#allocation8 + $0x390] sm:$0xff]
    %v1095 = vld [vmem:[#allocation8 + $0x398] sm:$0xff]
    %v1096 = vld [vmem:[#allocation8 + $0x3a0] sm:$0xff]
    %v1097 = vld [vmem:[#allocation8 + $0x3a8] sm:$0xff]
    %v1098 = vld [vmem:[#allocation8 + $0x3b0] sm:$0xff]
    %v1099 = vld [vmem:[#allocation8 + $0x3b8] sm:$0xff]
    %v1100 = vld [vmem:[#allocation8 + $0x3c0] sm:$0xff]
    %v1101 = vld [vmem:[#allocation8 + $0x3c8] sm:$0xff]
    %v1102 = vld [vmem:[#allocation8 + $0x3d0] sm:$0xff]
    %v1103 = vld [vmem:[#allocation8 + $0x3d8] sm:$0xff]
    %v1104 = vld [vmem:[#allocation8 + $0x3e0] sm:$0xff]
    %v1105 = vld [vmem:[#allocation8 + $0x3e8] sm:$0xff]
    %v1106 = vld [vmem:[#allocation8 + $0x3f0] sm:$0xff]
    %v1107 = vld [vmem:[#allocation8 + $0x3f8] sm:$0xff]
    %v1108 = vld [vmem:[#allocation8 + $0x400] sm:$0xff]
    %v1109 = vld [vmem:[#allocation8 + $0x408] sm:$0xff]
    %v1110 = vld [vmem:[#allocation8 + $0x410] sm:$0xff]
    %v1111 = vld [vmem:[#allocation8 + $0x418] sm:$0xff]
    %v1112 = vld [vmem:[#allocation8 + $0x420] sm:$0xff]
    %v1113 = vld [vmem:[#allocation8 + $0x428] sm:$0xff]
    %v1114 = vld [vmem:[#allocation8 + $0x430] sm:$0xff]
    %v1115 = vld [vmem:[#allocation8 + $0x438] sm:$0xff]
    %v1116 = vld [vmem:[#allocation8 + $0x440] sm:$0xff]
    %v1117 = vld [vmem:[#allocation8 + $0x448] sm:$0xff]
    %v1118 = vld [vmem:[#allocation8 + $0x450] sm:$0xff]
    %v1119 = vld [vmem:[#allocation8 + $0x458] sm:$0xff]
    %v1120 = vld [vmem:[#allocation8 + $0x460] sm:$0xff]
    %v1121 = vld [vmem:[#allocation8 + $0x468] sm:$0xff]
    %v1122 = vld [vmem:[#allocation8 + $0x470] sm:$0xff]
    %v1123 = vld [vmem:[#allocation8 + $0x478] sm:$0xff]
    %v1124 = vld [vmem:[#allocation8 + $0x480] sm:$0xff]
    %v1125 = vld [vmem:[#allocation8 + $0x488] sm:$0xff]
    %v1126 = vld [vmem:[#allocation8 + $0x490] sm:$0xff]
    %v1127 = vld [vmem:[#allocation8 + $0x498] sm:$0xff]
    %v1128 = vld [vmem:[#allocation8 + $0x4a0] sm:$0xff]
    %v1129 = vld [vmem:[#allocation8 + $0x4a8] sm:$0xff]
    %v1130 = vld [vmem:[#allocation8 + $0x4b0] sm:$0xff]
    %v1131 = vld [vmem:[#allocation8 + $0x4b8] sm:$0xff]
    %v1132 = vld [vmem:[#allocation8 + $0x4c0] sm:$0xff]
    %v1133 = vld [vmem:[#allocation8 + $0x4c8] sm:$0xff]
    %v1134 = vld [vmem:[#allocation8 + $0x4d0] sm:$0xff]
    %v1135 = vld [vmem:[#allocation8 + $0x4d8] sm:$0xff]
    %v1136 = vld [vmem:[#allocation8 + $0x4e0] sm:$0xff]
    %v1137 = vld [vmem:[#allocation8 + $0x4e8] sm:$0xff]
    %v1138 = vld [vmem:[#allocation8 + $0x4f0] sm:$0xff]
    %v1139 = vld [vmem:[#allocation8 + $0x4f8] sm:$0xff]
    %v1140 = vld [vmem:[#allocation8 + $0x500] sm:$0xff]
    %v1141 = vld [vmem:[#allocation8 + $0x508] sm:$0xff]
    %v1142 = vld [vmem:[#allocation8 + $0x510] sm:$0xff]
    %v1143 = vld [vmem:[#allocation8 + $0x518] sm:$0xff]
    %v1144 = vld [vmem:[#allocation8 + $0x520] sm:$0xff]
    %v1145 = vld [vmem:[#allocation8 + $0x528] sm:$0xff]
    %v1146 = vld [vmem:[#allocation8 + $0x530] sm:$0xff]
    %v1147 = vld [vmem:[#allocation8 + $0x538] sm:$0xff]
    %v1148 = vld [vmem:[#allocation8 + $0x540] sm:$0xff]
    %v1149 = vld [vmem:[#allocation8 + $0x548] sm:$0xff]
    %v1150 = vld [vmem:[#allocation8 + $0x550] sm:$0xff]
    %v1151 = vld [vmem:[#allocation8 + $0x558] sm:$0xff]
    %v1152 = vld [vmem:[#allocation8 + $0x560] sm:$0xff]
    %v1153 = vld [vmem:[#allocation8 + $0x568] sm:$0xff]
    %v1154 = vld [vmem:[#allocation8 + $0x570] sm:$0xff]
    %v1155 = vld [vmem:[#allocation8 + $0x578] sm:$0xff]
    %v1156 = vld [vmem:[#allocation8 + $0x580] sm:$0xff]
    %v1157 = vld [vmem:[#allocation8 + $0x588] sm:$0xff]
    %v1158 = vld [vmem:[#allocation8 + $0x590] sm:$0xff]
    %v1159 = vld [vmem:[#allocation8 + $0x598] sm:$0xff]
    %v1160 = vld [vmem:[#allocation8 + $0x5a0] sm:$0xff]
    %v1161 = vld [vmem:[#allocation8 + $0x5a8] sm:$0xff]
    %v1162 = vld [vmem:[#allocation8 + $0x5b0] sm:$0xff]
    %v1163 = vld [vmem:[#allocation8 + $0x5b8] sm:$0xff]
    %v1164 = vld [vmem:[#allocation8 + $0x5c0] sm:$0xff]
    %v1165 = vld [vmem:[#allocation8 + $0x5c8] sm:$0xff]
    %v1166 = vld [vmem:[#allocation8 + $0x5d0] sm:$0xff]
    %v1167 = vld [vmem:[#allocation8 + $0x5d8] sm:$0xff]
    %v1168 = vld [vmem:[#allocation8 + $0x5e0] sm:$0xff]
    %v1169 = vld [vmem:[#allocation8 + $0x5e8] sm:$0xff]
    %v1170 = vld [vmem:[#allocation8 + $0x5f0] sm:$0xff]
    %v1171 = vld [vmem:[#allocation8 + $0x5f8] sm:$0xff]
    %v1172 = vld [vmem:[#allocation8 + $0x600] sm:$0xff]
    %v1173 = vld [vmem:[#allocation8 + $0x608] sm:$0xff]
    %v1174 = vld [vmem:[#allocation8 + $0x610] sm:$0xff]
    %v1175 = vld [vmem:[#allocation8 + $0x618] sm:$0xff]
    %v1176 = vld [vmem:[#allocation8 + $0x620] sm:$0xff]
    %v1177 = vld [vmem:[#allocation8 + $0x628] sm:$0xff]
    %v1178 = vld [vmem:[#allocation8 + $0x630] sm:$0xff]
    %v1179 = vld [vmem:[#allocation8 + $0x638] sm:$0xff]
    %v1180 = vld [vmem:[#allocation8 + $0x640] sm:$0xff]
    %v1181 = vld [vmem:[#allocation8 + $0x648] sm:$0xff]
    %v1182 = vld [vmem:[#allocation8 + $0x650] sm:$0xff]
    %v1183 = vld [vmem:[#allocation8 + $0x658] sm:$0xff]
    %v1184 = vld [vmem:[#allocation8 + $0x660] sm:$0xff]
    %v1185 = vld [vmem:[#allocation8 + $0x668] sm:$0xff]
    %v1186 = vld [vmem:[#allocation8 + $0x670] sm:$0xff]
    %v1187 = vld [vmem:[#allocation8 + $0x678] sm:$0xff]
    %v1188 = vld [vmem:[#allocation8 + $0x680] sm:$0xff]
    %v1189 = vld [vmem:[#allocation8 + $0x688] sm:$0xff]
    %v1190 = vld [vmem:[#allocation8 + $0x690] sm:$0xff]
    %v1191 = vld [vmem:[#allocation8 + $0x698] sm:$0xff]
    %v1192 = vld [vmem:[#allocation8 + $0x6a0] sm:$0xff]
    %v1193 = vld [vmem:[#allocation8 + $0x6a8] sm:$0xff]
    %v1194 = vld [vmem:[#allocation8 + $0x6b0] sm:$0xff]
    %v1195 = vld [vmem:[#allocation8 + $0x6b8] sm:$0xff]
    %v1196 = vld [vmem:[#allocation8 + $0x6c0] sm:$0xff]
    %v1197 = vld [vmem:[#allocation8 + $0x6c8] sm:$0xff]
    %v1198 = vld [vmem:[#allocation8 + $0x6d0] sm:$0xff]
    %v1199 = vld [vmem:[#allocation8 + $0x6d8] sm:$0xff]
    %v1200 = vld [vmem:[#allocation8 + $0x6e0] sm:$0xff]
    %v1201 = vld [vmem:[#allocation8 + $0x6e8] sm:$0xff]
    %v1202 = vld [vmem:[#allocation8 + $0x6f0] sm:$0xff]
    %v1203 = vld [vmem:[#allocation8 + $0x6f8] sm:$0xff]
    %v1204 = vld [vmem:[#allocation8 + $0x700] sm:$0xff]
    %v1205 = vld [vmem:[#allocation8 + $0x708] sm:$0xff]
    %v1206 = vld [vmem:[#allocation8 + $0x710] sm:$0xff]
    %v1207 = vld [vmem:[#allocation8 + $0x718] sm:$0xff]
    %v1208 = vld [vmem:[#allocation8 + $0x720] sm:$0xff]
    %v1209 = vld [vmem:[#allocation8 + $0x728] sm:$0xff]
    %v1210 = vld [vmem:[#allocation8 + $0x730] sm:$0xff]
    %v1211 = vld [vmem:[#allocation8 + $0x738] sm:$0xff]
    %v1212 = vld [vmem:[#allocation8 + $0x740] sm:$0xff]
    %v1213 = vld [vmem:[#allocation8 + $0x748] sm:$0xff]
    %v1214 = vld [vmem:[#allocation8 + $0x750] sm:$0xff]
    %v1215 = vld [vmem:[#allocation8 + $0x758] sm:$0xff]
    %v1216 = vld [vmem:[#allocation8 + $0x760] sm:$0xff]
    %v1217 = vld [vmem:[#allocation8 + $0x768] sm:$0xff]
    %v1218 = vld [vmem:[#allocation8 + $0x770] sm:$0xff]
    %v1219 = vld [vmem:[#allocation8 + $0x778] sm:$0xff]
    %v1220 = vld [vmem:[#allocation8 + $0x780] sm:$0xff]
    %v1221 = vld [vmem:[#allocation8 + $0x788] sm:$0xff]
    %v1222 = vld [vmem:[#allocation8 + $0x790] sm:$0xff]
    %v1223 = vld [vmem:[#allocation8 + $0x798] sm:$0xff]
    %v1224 = vld [vmem:[#allocation8 + $0x7a0] sm:$0xff]
    %v1225 = vld [vmem:[#allocation8 + $0x7a8] sm:$0xff]
    %v1226 = vld [vmem:[#allocation8 + $0x7b0] sm:$0xff]
    %v1227 = vld [vmem:[#allocation8 + $0x7b8] sm:$0xff]
    %v1228 = vld [vmem:[#allocation8 + $0x7c0] sm:$0xff]
    %v1229 = vld [vmem:[#allocation8 + $0x7c8] sm:$0xff]
    %v1230 = vld [vmem:[#allocation8 + $0x7d0] sm:$0xff]
    %v1231 = vld [vmem:[#allocation8 + $0x7d8] sm:$0xff]
    %v1232 = vld [vmem:[#allocation8 + $0x7e0] sm:$0xff]
    %v1233 = vld [vmem:[#allocation8 + $0x7e8] sm:$0xff]
    %v1234 = vld [vmem:[#allocation8 + $0x7f0] sm:$0xff]
    %v1235 = vld [vmem:[#allocation8 + $0x7f8] sm:$0xff]
    %v1236 = vld [vmem:[#allocation8 + $0x800] sm:$0xff]
    %v1237 = vld [vmem:[#allocation8 + $0x808] sm:$0xff]
    %v1238 = vld [vmem:[#allocation8 + $0x810] sm:$0xff]
    %v1239 = vld [vmem:[#allocation8 + $0x818] sm:$0xff]
    %v1240 = vld [vmem:[#allocation8 + $0x820] sm:$0xff]
    %v1241 = vld [vmem:[#allocation8 + $0x828] sm:$0xff]
    %v1242 = vld [vmem:[#allocation8 + $0x830] sm:$0xff]
    %v1243 = vld [vmem:[#allocation8 + $0x838] sm:$0xff]
    %v1244 = vld [vmem:[#allocation8 + $0x840] sm:$0xff]
    %v1245 = vld [vmem:[#allocation8 + $0x848] sm:$0xff]
    %v1246 = vld [vmem:[#allocation8 + $0x850] sm:$0xff]
    %v1247 = vld [vmem:[#allocation8 + $0x858] sm:$0xff]
    %v1248 = vld [vmem:[#allocation8 + $0x860] sm:$0xff]
    %v1249 = vld [vmem:[#allocation8 + $0x868] sm:$0xff]
    %v1250 = vld [vmem:[#allocation8 + $0x870] sm:$0xff]
    %v1251 = vld [vmem:[#allocation8 + $0x878] sm:$0xff]
    %v1252 = vld [vmem:[#allocation8 + $0x880] sm:$0xff]
    %v1253 = vld [vmem:[#allocation8 + $0x888] sm:$0xff]
    %v1254 = vld [vmem:[#allocation8 + $0x890] sm:$0xff]
    %v1255 = vld [vmem:[#allocation8 + $0x898] sm:$0xff]
    %v1256 = vld [vmem:[#allocation8 + $0x8a0] sm:$0xff]
    %v1257 = vld [vmem:[#allocation8 + $0x8a8] sm:$0xff]
    %v1258 = vld [vmem:[#allocation8 + $0x8b0] sm:$0xff]
    %v1259 = vld [vmem:[#allocation8 + $0x8b8] sm:$0xff]
    %v1260 = vld [vmem:[#allocation8 + $0x8c0] sm:$0xff]
    %v1261 = vld [vmem:[#allocation8 + $0x8c8] sm:$0xff]
    %v1262 = vld [vmem:[#allocation8 + $0x8d0] sm:$0xff]
    %v1263 = vld [vmem:[#allocation8 + $0x8d8] sm:$0xff]
    %v1264 = vld [vmem:[#allocation8 + $0x8e0] sm:$0xff]
    %v1265 = vld [vmem:[#allocation8 + $0x8e8] sm:$0xff]
    %v1266 = vld [vmem:[#allocation8 + $0x8f0] sm:$0xff]
    %v1267 = vld [vmem:[#allocation8 + $0x8f8] sm:$0xff]
    %v1268 = vld [vmem:[#allocation8 + $0x900] sm:$0xff]
    %v1269 = vld [vmem:[#allocation8 + $0x908] sm:$0xff]
    %v1270 = vld [vmem:[#allocation8 + $0x910] sm:$0xff]
    %v1271 = vld [vmem:[#allocation8 + $0x918] sm:$0xff]
    %v1272 = vld [vmem:[#allocation8 + $0x920] sm:$0xff]
    %v1273 = vld [vmem:[#allocation8 + $0x928] sm:$0xff]
    %v1274 = vld [vmem:[#allocation8 + $0x930] sm:$0xff]
    %v1275 = vld [vmem:[#allocation8 + $0x938] sm:$0xff]
    %v1276 = vld [vmem:[#allocation8 + $0x940] sm:$0xff]
    %v1277 = vld [vmem:[#allocation8 + $0x948] sm:$0xff]
    %v1278 = vld [vmem:[#allocation8 + $0x950] sm:$0xff]
    %v1279 = vld [vmem:[#allocation8 + $0x958] sm:$0xff]
    %v1280 = vld [vmem:[#allocation8 + $0x960] sm:$0xff]
    %v1281 = vld [vmem:[#allocation8 + $0x968] sm:$0xff]
    %v1282 = vld [vmem:[#allocation8 + $0x970] sm:$0xff]
    %v1283 = vld [vmem:[#allocation8 + $0x978] sm:$0xff]
    %v1284 = vld [vmem:[#allocation8 + $0x980] sm:$0xff]
    %v1285 = vld [vmem:[#allocation8 + $0x988] sm:$0xff]
    %v1286 = vld [vmem:[#allocation8 + $0x990] sm:$0xff]
    %v1287 = vld [vmem:[#allocation8 + $0x998] sm:$0xff]
    %v1288 = vld [vmem:[#allocation8 + $0x9a0] sm:$0xff]
    %v1289 = vld [vmem:[#allocation8 + $0x9a8] sm:$0xff]
    %v1290 = vld [vmem:[#allocation8 + $0x9b0] sm:$0xff]
    %v1291 = vld [vmem:[#allocation8 + $0x9b8] sm:$0xff]
    %v1292 = vld [vmem:[#allocation8 + $0x9c0] sm:$0xff]
    %v1293 = vld [vmem:[#allocation8 + $0x9c8] sm:$0xff]
    %v1294 = vld [vmem:[#allocation8 + $0x9d0] sm:$0xff]
    %v1295 = vld [vmem:[#allocation8 + $0x9d8] sm:$0xff]
    %v1296 = vld [vmem:[#allocation8 + $0x9e0] sm:$0xff]
    %v1297 = vld [vmem:[#allocation8 + $0x9e8] sm:$0xff]
    %v1298 = vld [vmem:[#allocation8 + $0x9f0] sm:$0xff]
    %v1299 = vld [vmem:[#allocation8 + $0x9f8] sm:$0xff]
    %v1300 = vld [vmem:[#allocation8 + $0xa00] sm:$0xff]
    %v1301 = vld [vmem:[#allocation8 + $0xa08] sm:$0xff]
    %v1302 = vld [vmem:[#allocation8 + $0xa10] sm:$0xff]
    %v1303 = vld [vmem:[#allocation8 + $0xa18] sm:$0xff]
    %v1304 = vld [vmem:[#allocation8 + $0xa20] sm:$0xff]
    %v1305 = vld [vmem:[#allocation8 + $0xa28] sm:$0xff]
    %v1306 = vld [vmem:[#allocation8 + $0xa30] sm:$0xff]
    %v1307 = vld [vmem:[#allocation8 + $0xa38] sm:$0xff]
    %v1308 = vld [vmem:[#allocation8 + $0xa40] sm:$0xff]
    %v1309 = vld [vmem:[#allocation8 + $0xa48] sm:$0xff]
    %v1310 = vld [vmem:[#allocation8 + $0xa50] sm:$0xff]
    %v1311 = vld [vmem:[#allocation8 + $0xa58] sm:$0xff]
    %v1312 = vld [vmem:[#allocation8 + $0xa60] sm:$0xff]
    %v1313 = vld [vmem:[#allocation8 + $0xa68] sm:$0xff]
    %v1314 = vld [vmem:[#allocation8 + $0xa70] sm:$0xff]
    %v1315 = vld [vmem:[#allocation8 + $0xa78] sm:$0xff]
    %v1316 = vld [vmem:[#allocation8 + $0xa80] sm:$0xff]
    %v1317 = vld [vmem:[#allocation8 + $0xa88] sm:$0xff]
    %v1318 = vld [vmem:[#allocation8 + $0xa90] sm:$0xff]
    %v1319 = vld [vmem:[#allocation8 + $0xa98] sm:$0xff]
    %v1320 = vld [vmem:[#allocation8 + $0xaa0] sm:$0xff]
    %v1321 = vld [vmem:[#allocation8 + $0xaa8] sm:$0xff]
    %v1322 = vld [vmem:[#allocation8 + $0xab0] sm:$0xff]
    %v1323 = vld [vmem:[#allocation8 + $0xab8] sm:$0xff]
    %v1324 = vld [vmem:[#allocation8 + $0xac0] sm:$0xff]
    %v1325 = vld [vmem:[#allocation8 + $0xac8] sm:$0xff]
    %v1326 = vld [vmem:[#allocation8 + $0xad0] sm:$0xff]
    %v1327 = vld [vmem:[#allocation8 + $0xad8] sm:$0xff]
    %v1328 = vld [vmem:[#allocation8 + $0xae0] sm:$0xff]
    %v1329 = vld [vmem:[#allocation8 + $0xae8] sm:$0xff]
    %v1330 = vld [vmem:[#allocation8 + $0xaf0] sm:$0xff]
    %v1331 = vld [vmem:[#allocation8 + $0xaf8] sm:$0xff]
    %v1332 = vld [vmem:[#allocation8 + $0xb00] sm:$0xff]
    %v1333 = vld [vmem:[#allocation8 + $0xb08] sm:$0xff]
    %v1334 = vld [vmem:[#allocation8 + $0xb10] sm:$0xff]
    %v1335 = vld [vmem:[#allocation8 + $0xb18] sm:$0xff]
    %v1336 = vld [vmem:[#allocation8 + $0xb20] sm:$0xff]
    %v1337 = vld [vmem:[#allocation8 + $0xb28] sm:$0xff]
    %v1338 = vld [vmem:[#allocation8 + $0xb30] sm:$0xff]
    %v1339 = vld [vmem:[#allocation8 + $0xb38] sm:$0xff]
    %v1340 = vld [vmem:[#allocation8 + $0xb40] sm:$0xff]
    %v1341 = vld [vmem:[#allocation8 + $0xb48] sm:$0xff]
    %v1342 = vld [vmem:[#allocation8 + $0xb50] sm:$0xff]
    %v1343 = vld [vmem:[#allocation8 + $0xb58] sm:$0xff]
    %v1344 = vld [vmem:[#allocation8 + $0xb60] sm:$0xff]
    %v1345 = vld [vmem:[#allocation8 + $0xb68] sm:$0xff]
    %v1346 = vld [vmem:[#allocation8 + $0xb70] sm:$0xff]
    %v1347 = vld [vmem:[#allocation8 + $0xb78] sm:$0xff]
    %v1348 = vld [vmem:[#allocation8 + $0xb80] sm:$0xff]
    %v1349 = vld [vmem:[#allocation8 + $0xb88] sm:$0xff]
    %v1350 = vld [vmem:[#allocation8 + $0xb90] sm:$0xff]
    %v1351 = vld [vmem:[#allocation8 + $0xb98] sm:$0xff]
    %v1352 = vld [vmem:[#allocation8 + $0xba0] sm:$0xff]
    %v1353 = vld [vmem:[#allocation8 + $0xba8] sm:$0xff]
    %v1354 = vld [vmem:[#allocation8 + $0xbb0] sm:$0xff]
    %v1355 = vld [vmem:[#allocation8 + $0xbb8] sm:$0xff]
    %v1356 = vld [vmem:[#allocation8 + $0xbc0] sm:$0xff]
    %v1357 = vld [vmem:[#allocation8 + $0xbc8] sm:$0xff]
    %v1358 = vld [vmem:[#allocation8 + $0xbd0] sm:$0xff]
    %v1359 = vld [vmem:[#allocation8 + $0xbd8] sm:$0xff]
    %v1360 = vld [vmem:[#allocation8 + $0xbe0] sm:$0xff]
    %v1361 = vld [vmem:[#allocation8 + $0xbe8] sm:$0xff]
    %v1362 = vld [vmem:[#allocation8 + $0xbf0] sm:$0xff]
    %v1363 = vld [vmem:[#allocation8 + $0xbf8] sm:$0xff]
    %v1364 = vld [vmem:[#allocation10] sm:$0x3f]
    %v1366 = vlaneseq
    %v1367 = vshrl.u32 %v1366, 7
    %v1368 = vsub.s32 0, %v1367
    %v1369 = vrot.slane %v1364, %v1368
    %v1370 = vlaneseq
    %v1371 = vshrl.u32 %v1370, 7
    %v1372 = vsub.s32 1, %v1371
    %v1373 = vrot.slane %v1364, %v1372
    %v1374 = vlaneseq
    %v1375 = vshrl.u32 %v1374, 7
    %v1376 = vsub.s32 2, %v1375
    %v1377 = vrot.slane %v1364, %v1376
    %v1378 = vlaneseq
    %v1379 = vshrl.u32 %v1378, 7
    %v1380 = vsub.s32 3, %v1379
    %v1381 = vrot.slane %v1364, %v1380
    %v1382 = vlaneseq
    %v1383 = vshrl.u32 %v1382, 7
    %v1384 = vsub.s32 4, %v1383
    %v1385 = vrot.slane %v1364, %v1384
    %v1386 = vlaneseq
    %v1387 = vshrl.u32 %v1386, 7
    %v1388 = vsub.s32 5, %v1387
    %v1389 = vrot.slane %v1364, %v1388
    %1396 = vmatprep.subr.mxu0 %v981
    %1397 = vmatpush1.msra.mxu0 %v980
    %1398 = vmatprep.subr.mxu0 %v987
    %1399 = vmatpush1.msra.mxu0 %v986
    %1400 = vmatprep.subr.mxu0 %v993
    %1401 = vmatpush1.msra.mxu0 %v992
    %1402 = vmatprep.subr.mxu0 %v999
    %1403 = vmatpush1.msra.mxu0 %v998
    %1404 = vmatprep.subr.mxu0 %v1005
    %1405 = vmatpush1.msra.mxu0 %v1004
    %1406 = vmatprep.subr.mxu0 %v1011
    %1407 = vmatpush1.msra.mxu0 %v1010
    %1408 = vmatprep.subr.mxu0 %v1017
    %1409 = vmatpush1.msra.mxu0 %v1016
    %1410 = vmatprep.subr.mxu0 %v1023
    %1411 = vmatpush1.msra.mxu0 %v1022
    %1412 = vmatprep.subr.mxu0 %v1029
    %1413 = vmatpush1.msra.mxu0 %v1028
    %1414 = vmatprep.subr.mxu0 %v1035
    %1415 = vmatpush1.msra.mxu0 %v1034
    %1416 = vmatprep.subr.mxu0 %v1041
    %1417 = vmatpush1.msra.mxu0 %v1040
    %1418 = vmatprep.subr.mxu0 %v1047
    %1419 = vmatpush1.msra.mxu0 %v1046
    %1420 = vmatprep.subr.mxu0 %v1053
    %1421 = vmatpush1.msra.mxu0 %v1052
    %1422 = vmatprep.subr.mxu0 %v1059
    %1423 = vmatpush1.msra.mxu0 %v1058
    %1424 = vmatprep.subr.mxu0 %v1065
    %1425 = vmatpush1.msra.mxu0 %v1064
    %1426 = vmatprep.subr.mxu0 %v1071
    %1427 = vmatpush1.msra.mxu0 %v1070
    %1428 = vmatprep.subr.mxu0 %v1077
    %1429 = vmatpush1.msra.mxu0 %v1076
    %1430 = vmatprep.subr.mxu0 %v1083
    %1431 = vmatpush1.msra.mxu0 %v1082
    %1432 = vmatprep.subr.mxu0 %v1089
    %1433 = vmatpush1.msra.mxu0 %v1088
    %1434 = vmatprep.subr.mxu0 %v1095
    %1435 = vmatpush1.msra.mxu0 %v1094
    %1436 = vmatprep.subr.mxu0 %v1101
    %1437 = vmatpush1.msra.mxu0 %v1100
    %1438 = vmatprep.subr.mxu0 %v1107
    %1439 = vmatpush1.msra.mxu0 %v1106
    %1440 = vmatprep.subr.mxu0 %v1113
    %1441 = vmatpush1.msra.mxu0 %v1112
    %1442 = vmatprep.subr.mxu0 %v1119
    %1443 = vmatpush1.msra.mxu0 %v1118
    %1444 = vmatprep.subr.mxu0 %v1125
    %1445 = vmatpush1.msra.mxu0 %v1124
    %1446 = vmatprep.subr.mxu0 %v1131
    %1447 = vmatpush1.msra.mxu0 %v1130
    %1448 = vmatprep.subr.mxu0 %v1137
    %1449 = vmatpush1.msra.mxu0 %v1136
    %1450 = vmatprep.subr.mxu0 %v1143
    %1451 = vmatpush1.msra.mxu0 %v1142
    %1452 = vmatprep.subr.mxu0 %v1149
    %1453 = vmatpush1.msra.mxu0 %v1148
    %1454 = vmatprep.subr.mxu0 %v1155
    %1455 = vmatpush1.msra.mxu0 %v1154
    %1456 = vmatprep.subr.mxu0 %v1161
    %1457 = vmatpush1.msra.mxu0 %v1160
    %1458 = vmatprep.subr.mxu0 %v1167
    %1459 = vmatpush1.msra.mxu0 %v1166
    %1460 = vmatprep.mubr.f32.mxu0 %v977
    %1461 = vmatmul.mubr.f32.gmra.mrb[0].mxu0 %v976
    %v1462 = vpop.f32.mrb[0].mxu0
    %v1463 = vadd.f32 %v1369, %v1462
    %v1464 = vpop.f32.mrb[0].mxu0
    %v1465 = vadd.f32 %v1373, %v1464
    %1466 = vdwg.mxu0
    %1467 = vmatprep.subr.mxu0 %v1173
    %1468 = vmatpush1.msra.mxu0 %v1172
    %1469 = vmatprep.subr.mxu0 %v1179
    %1470 = vmatpush1.msra.mxu0 %v1178
    %1471 = vmatprep.subr.mxu0 %v1185
    %1472 = vmatpush1.msra.mxu0 %v1184
    %1473 = vmatprep.subr.mxu0 %v1191
    %1474 = vmatpush1.msra.mxu0 %v1190
    %1475 = vmatprep.subr.mxu0 %v1197
    %1476 = vmatpush1.msra.mxu0 %v1196
    %1477 = vmatprep.subr.mxu0 %v1203
    %1478 = vmatpush1.msra.mxu0 %v1202
    %1479 = vmatprep.subr.mxu0 %v1209
    %1480 = vmatpush1.msra.mxu0 %v1208
    %1481 = vmatprep.subr.mxu0 %v1215
    %1482 = vmatpush1.msra.mxu0 %v1214
    %1483 = vmatprep.subr.mxu0 %v1221
    %1484 = vmatpush1.msra.mxu0 %v1220
    %1485 = vmatprep.subr.mxu0 %v1227
    %1486 = vmatpush1.msra.mxu0 %v1226
    %1487 = vmatprep.subr.mxu0 %v1233
    %1488 = vmatpush1.msra.mxu0 %v1232
    %1489 = vmatprep.subr.mxu0 %v1239
    %1490 = vmatpush1.msra.mxu0 %v1238
    %1491 = vmatprep.subr.mxu0 %v1245
    %1492 = vmatpush1.msra.mxu0 %v1244
    %1493 = vmatprep.subr.mxu0 %v1251
    %1494 = vmatpush1.msra.mxu0 %v1250
    %1495 = vmatprep.subr.mxu0 %v1257
    %1496 = vmatpush1.msra.mxu0 %v1256
    %1497 = vmatprep.subr.mxu0 %v1263
    %1498 = vmatpush1.msra.mxu0 %v1262
    %1499 = vmatprep.subr.mxu0 %v1269
    %1500 = vmatpush1.msra.mxu0 %v1268
    %1501 = vmatprep.subr.mxu0 %v1275
    %1502 = vmatpush1.msra.mxu0 %v1274
    %1503 = vmatprep.subr.mxu0 %v1281
    %1504 = vmatpush1.msra.mxu0 %v1280
    %1505 = vmatprep.subr.mxu0 %v1287
    %1506 = vmatpush1.msra.mxu0 %v1286
    %1507 = vmatprep.subr.mxu0 %v1293
    %1508 = vmatpush1.msra.mxu0 %v1292
    %1509 = vmatprep.subr.mxu0 %v1299
    %1510 = vmatpush1.msra.mxu0 %v1298
    %1511 = vmatprep.subr.mxu0 %v1305
    %1512 = vmatpush1.msra.mxu0 %v1304
    %1513 = vmatprep.subr.mxu0 %v1311
    %1514 = vmatpush1.msra.mxu0 %v1310
    %1515 = vmatprep.subr.mxu0 %v1317
    %1516 = vmatpush1.msra.mxu0 %v1316
    %1517 = vmatprep.subr.mxu0 %v1323
    %1518 = vmatpush1.msra.mxu0 %v1322
    %1519 = vmatprep.subr.mxu0 %v1329
    %1520 = vmatpush1.msra.mxu0 %v1328
    %1521 = vmatprep.subr.mxu0 %v1335
    %1522 = vmatpush1.msra.mxu0 %v1334
    %1523 = vmatprep.subr.mxu0 %v1341
    %1524 = vmatpush1.msra.mxu0 %v1340
    %1525 = vmatprep.subr.mxu0 %v1347
    %1526 = vmatpush1.msra.mxu0 %v1346
    %1527 = vmatprep.subr.mxu0 %v1353
    %1528 = vmatpush1.msra.mxu0 %v1352
    %1529 = vmatprep.subr.mxu0 %v1359
    %1530 = vmatpush1.msra.mxu0 %v1358
    %1531 = vmatprep.mubr.f32.mxu0 %v979
    %1532 = vmatmul.mubr.f32.gmra.mrb[0].mxu0 %v978
    %v1533 = vpop.f32.mrb[0].mxu0
    %v1534 = vadd.f32 %v1463, %v1533
    %v1535 = vpop.f32.mrb[0].mxu0
    %v1536 = vadd.f32 %v1465, %v1535
    %1537 = vdwg.mxu0
    %1538 = vmatprep.subr.mxu0 %v983
    %1539 = vmatpush1.msra.mxu0 %v982
    %1540 = vmatprep.subr.mxu0 %v989
    %1541 = vmatpush1.msra.mxu0 %v988
    %1542 = vmatprep.subr.mxu0 %v995
    %1543 = vmatpush1.msra.mxu0 %v994
    %1544 = vmatprep.subr.mxu0 %v1001
    %1545 = vmatpush1.msra.mxu0 %v1000
    %1546 = vmatprep.subr.mxu0 %v1007
    %1547 = vmatpush1.msra.mxu0 %v1006
    %1548 = vmatprep.subr.mxu0 %v1013
    %1549 = vmatpush1.msra.mxu0 %v1012
    %1550 = vmatprep.subr.mxu0 %v1019
    %1551 = vmatpush1.msra.mxu0 %v1018
    %1552 = vmatprep.subr.mxu0 %v1025
    %1553 = vmatpush1.msra.mxu0 %v1024
    %1554 = vmatprep.subr.mxu0 %v1031
    %1555 = vmatpush1.msra.mxu0 %v1030
    %1556 = vmatprep.subr.mxu0 %v1037
    %1557 = vmatpush1.msra.mxu0 %v1036
    %1558 = vmatprep.subr.mxu0 %v1043
    %1559 = vmatpush1.msra.mxu0 %v1042
    %1560 = vmatprep.subr.mxu0 %v1049
    %1561 = vmatpush1.msra.mxu0 %v1048
    %1562 = vmatprep.subr.mxu0 %v1055
    %1563 = vmatpush1.msra.mxu0 %v1054
    %1564 = vmatprep.subr.mxu0 %v1061
    %1565 = vmatpush1.msra.mxu0 %v1060
    %1566 = vmatprep.subr.mxu0 %v1067
    %1567 = vmatpush1.msra.mxu0 %v1066
    %1568 = vmatprep.subr.mxu0 %v1073
    %1569 = vmatpush1.msra.mxu0 %v1072
    %1570 = vmatprep.subr.mxu0 %v1079
    %1571 = vmatpush1.msra.mxu0 %v1078
    %1572 = vmatprep.subr.mxu0 %v1085
    %1573 = vmatpush1.msra.mxu0 %v1084
    %1574 = vmatprep.subr.mxu0 %v1091
    %1575 = vmatpush1.msra.mxu0 %v1090
    %1576 = vmatprep.subr.mxu0 %v1097
    %1577 = vmatpush1.msra.mxu0 %v1096
    %1578 = vmatprep.subr.mxu0 %v1103
    %1579 = vmatpush1.msra.mxu0 %v1102
    %1580 = vmatprep.subr.mxu0 %v1109
    %1581 = vmatpush1.msra.mxu0 %v1108
    %1582 = vmatprep.subr.mxu0 %v1115
    %1583 = vmatpush1.msra.mxu0 %v1114
    %1584 = vmatprep.subr.mxu0 %v1121
    %1585 = vmatpush1.msra.mxu0 %v1120
    %1586 = vmatprep.subr.mxu0 %v1127
    %1587 = vmatpush1.msra.mxu0 %v1126
    %1588 = vmatprep.subr.mxu0 %v1133
    %1589 = vmatpush1.msra.mxu0 %v1132
    %1590 = vmatprep.subr.mxu0 %v1139
    %1591 = vmatpush1.msra.mxu0 %v1138
    %1592 = vmatprep.subr.mxu0 %v1145
    %1593 = vmatpush1.msra.mxu0 %v1144
    %1594 = vmatprep.subr.mxu0 %v1151
    %1595 = vmatpush1.msra.mxu0 %v1150
    %1596 = vmatprep.subr.mxu0 %v1157
    %1597 = vmatpush1.msra.mxu0 %v1156
    %1598 = vmatprep.subr.mxu0 %v1163
    %1599 = vmatpush1.msra.mxu0 %v1162
    %1600 = vmatprep.subr.mxu0 %v1169
    %1601 = vmatpush1.msra.mxu0 %v1168
    %1602 = vmatprep.mubr.f32.mxu0 %v977
    %1603 = vmatmul.mubr.f32.gmra.mrb[0].mxu0 %v976
    %v1604 = vpop.f32.mrb[0].mxu0
    %v1605 = vadd.f32 %v1377, %v1604
    %v1606 = vpop.f32.mrb[0].mxu0
    %v1607 = vadd.f32 %v1381, %v1606
    %1608 = vdwg.mxu0
    %1609 = vmatprep.subr.mxu0 %v1175
    %1610 = vmatpush1.msra.mxu0 %v1174
    %1611 = vmatprep.subr.mxu0 %v1181
    %1612 = vmatpush1.msra.mxu0 %v1180
    %1613 = vmatprep.subr.mxu0 %v1187
    %1614 = vmatpush1.msra.mxu0 %v1186
    %1615 = vmatprep.subr.mxu0 %v1193
    %1616 = vmatpush1.msra.mxu0 %v1192
    %1617 = vmatprep.subr.mxu0 %v1199
    %1618 = vmatpush1.msra.mxu0 %v1198
    %1619 = vmatprep.subr.mxu0 %v1205
    %1620 = vmatpush1.msra.mxu0 %v1204
    %1621 = vmatprep.subr.mxu0 %v1211
    %1622 = vmatpush1.msra.mxu0 %v1210
    %1623 = vmatprep.subr.mxu0 %v1217
    %1624 = vmatpush1.msra.mxu0 %v1216
    %1625 = vmatprep.subr.mxu0 %v1223
    %1626 = vmatpush1.msra.mxu0 %v1222
    %1627 = vmatprep.subr.mxu0 %v1229
    %1628 = vmatpush1.msra.mxu0 %v1228
    %1629 = vmatprep.subr.mxu0 %v1235
    %1630 = vmatpush1.msra.mxu0 %v1234
    %1631 = vmatprep.subr.mxu0 %v1241
    %1632 = vmatpush1.msra.mxu0 %v1240
    %1633 = vmatprep.subr.mxu0 %v1247
    %1634 = vmatpush1.msra.mxu0 %v1246
    %1635 = vmatprep.subr.mxu0 %v1253
    %1636 = vmatpush1.msra.mxu0 %v1252
    %1637 = vmatprep.subr.mxu0 %v1259
    %1638 = vmatpush1.msra.mxu0 %v1258
    %1639 = vmatprep.subr.mxu0 %v1265
    %1640 = vmatpush1.msra.mxu0 %v1264
    %1641 = vmatprep.subr.mxu0 %v1271
    %1642 = vmatpush1.msra.mxu0 %v1270
    %1643 = vmatprep.subr.mxu0 %v1277
    %1644 = vmatpush1.msra.mxu0 %v1276
    %1645 = vmatprep.subr.mxu0 %v1283
    %1646 = vmatpush1.msra.mxu0 %v1282
    %1647 = vmatprep.subr.mxu0 %v1289
    %1648 = vmatpush1.msra.mxu0 %v1288
    %1649 = vmatprep.subr.mxu0 %v1295
    %1650 = vmatpush1.msra.mxu0 %v1294
    %1651 = vmatprep.subr.mxu0 %v1301
    %1652 = vmatpush1.msra.mxu0 %v1300
    %1653 = vmatprep.subr.mxu0 %v1307
    %1654 = vmatpush1.msra.mxu0 %v1306
    %1655 = vmatprep.subr.mxu0 %v1313
    %1656 = vmatpush1.msra.mxu0 %v1312
    %1657 = vmatprep.subr.mxu0 %v1319
    %1658 = vmatpush1.msra.mxu0 %v1318
    %1659 = vmatprep.subr.mxu0 %v1325
    %1660 = vmatpush1.msra.mxu0 %v1324
    %1661 = vmatprep.subr.mxu0 %v1331
    %1662 = vmatpush1.msra.mxu0 %v1330
    %1663 = vmatprep.subr.mxu0 %v1337
    %1664 = vmatpush1.msra.mxu0 %v1336
    %1665 = vmatprep.subr.mxu0 %v1343
    %1666 = vmatpush1.msra.mxu0 %v1342
    %1667 = vmatprep.subr.mxu0 %v1349
    %1668 = vmatpush1.msra.mxu0 %v1348
    %1669 = vmatprep.subr.mxu0 %v1355
    %1670 = vmatpush1.msra.mxu0 %v1354
    %1671 = vmatprep.subr.mxu0 %v1361
    %1672 = vmatpush1.msra.mxu0 %v1360
    %1673 = vmatprep.mubr.f32.mxu0 %v979
    %1674 = vmatmul.mubr.f32.gmra.mrb[0].mxu0 %v978
    %v1675 = vpop.f32.mrb[0].mxu0
    %v1676 = vadd.f32 %v1605, %v1675
    %v1677 = vpop.f32.mrb[0].mxu0
    %v1678 = vadd.f32 %v1607, %v1677
    %1679 = vdwg.mxu0
    %1680 = vmatprep.subr.mxu0 %v985
    %1681 = vmatpush1.msra.mxu0 %v984
    %1682 = vmatprep.subr.mxu0 %v991
    %1683 = vmatpush1.msra.mxu0 %v990
    %1684 = vmatprep.subr.mxu0 %v997
    %1685 = vmatpush1.msra.mxu0 %v996
    %1686 = vmatprep.subr.mxu0 %v1003
    %1687 = vmatpush1.msra.mxu0 %v1002
    %1688 = vmatprep.subr.mxu0 %v1009
    %1689 = vmatpush1.msra.mxu0 %v1008
    %1690 = vmatprep.subr.mxu0 %v1015
    %1691 = vmatpush1.msra.mxu0 %v1014
    %1692 = vmatprep.subr.mxu0 %v1021
    %1693 = vmatpush1.msra.mxu0 %v1020
    %1694 = vmatprep.subr.mxu0 %v1027
    %1695 = vmatpush1.msra.mxu0 %v1026
    %1696 = vmatprep.subr.mxu0 %v1033
    %1697 = vmatpush1.msra.mxu0 %v1032
    %1698 = vmatprep.subr.mxu0 %v1039
    %1699 = vmatpush1.msra.mxu0 %v1038
    %1700 = vmatprep.subr.mxu0 %v1045
    %1701 = vmatpush1.msra.mxu0 %v1044
    %1702 = vmatprep.subr.mxu0 %v1051
    %1703 = vmatpush1.msra.mxu0 %v1050
    %1704 = vmatprep.subr.mxu0 %v1057
    %1705 = vmatpush1.msra.mxu0 %v1056
    %1706 = vmatprep.subr.mxu0 %v1063
    %1707 = vmatpush1.msra.mxu0 %v1062
    %1708 = vmatprep.subr.mxu0 %v1069
    %1709 = vmatpush1.msra.mxu0 %v1068
    %1710 = vmatprep.subr.mxu0 %v1075
    %1711 = vmatpush1.msra.mxu0 %v1074
    %1712 = vmatprep.subr.mxu0 %v1081
    %1713 = vmatpush1.msra.mxu0 %v1080
    %1714 = vmatprep.subr.mxu0 %v1087
    %1715 = vmatpush1.msra.mxu0 %v1086
    %1716 = vmatprep.subr.mxu0 %v1093
    %1717 = vmatpush1.msra.mxu0 %v1092
    %1718 = vmatprep.subr.mxu0 %v1099
    %1719 = vmatpush1.msra.mxu0 %v1098
    %1720 = vmatprep.subr.mxu0 %v1105
    %1721 = vmatpush1.msra.mxu0 %v1104
    %1722 = vmatprep.subr.mxu0 %v1111
    %1723 = vmatpush1.msra.mxu0 %v1110
    %1724 = vmatprep.subr.mxu0 %v1117
    %1725 = vmatpush1.msra.mxu0 %v1116
    %1726 = vmatprep.subr.mxu0 %v1123
    %1727 = vmatpush1.msra.mxu0 %v1122
    %1728 = vmatprep.subr.mxu0 %v1129
    %1729 = vmatpush1.msra.mxu0 %v1128
    %1730 = vmatprep.subr.mxu0 %v1135
    %1731 = vmatpush1.msra.mxu0 %v1134
    %1732 = vmatprep.subr.mxu0 %v1141
    %1733 = vmatpush1.msra.mxu0 %v1140
    %1734 = vmatprep.subr.mxu0 %v1147
    %1735 = vmatpush1.msra.mxu0 %v1146
    %1736 = vmatprep.subr.mxu0 %v1153
    %1737 = vmatpush1.msra.mxu0 %v1152
    %1738 = vmatprep.subr.mxu0 %v1159
    %1739 = vmatpush1.msra.mxu0 %v1158
    %1740 = vmatprep.subr.mxu0 %v1165
    %1741 = vmatpush1.msra.mxu0 %v1164
    %1742 = vmatprep.subr.mxu0 %v1171
    %1743 = vmatpush1.msra.mxu0 %v1170
    %1744 = vmatprep.mubr.f32.mxu0 %v977
    %1745 = vmatmul.mubr.f32.gmra.mrb[0].mxu0 %v976
    %v1746 = vpop.f32.mrb[0].mxu0
    %v1747 = vadd.f32 %v1385, %v1746
    %v1748 = vpop.f32.mrb[0].mxu0
    %v1749 = vadd.f32 %v1389, %v1748
    %1750 = vdwg.mxu0
    %1751 = vmatprep.subr.mxu0 %v1177
    %1752 = vmatpush1.msra.mxu0 %v1176
    %1753 = vmatprep.subr.mxu0 %v1183
    %1754 = vmatpush1.msra.mxu0 %v1182
    %1755 = vmatprep.subr.mxu0 %v1189
    %1756 = vmatpush1.msra.mxu0 %v1188
    %1757 = vmatprep.subr.mxu0 %v1195
    %1758 = vmatpush1.msra.mxu0 %v1194
    %1759 = vmatprep.subr.mxu0 %v1201
    %1760 = vmatpush1.msra.mxu0 %v1200
    %1761 = vmatprep.subr.mxu0 %v1207
    %1762 = vmatpush1.msra.mxu0 %v1206
    %1763 = vmatprep.subr.mxu0 %v1213
    %1764 = vmatpush1.msra.mxu0 %v1212
    %1765 = vmatprep.subr.mxu0 %v1219
    %1766 = vmatpush1.msra.mxu0 %v1218
    %1767 = vmatprep.subr.mxu0 %v1225
    %1768 = vmatpush1.msra.mxu0 %v1224
    %1769 = vmatprep.subr.mxu0 %v1231
    %1770 = vmatpush1.msra.mxu0 %v1230
    %1771 = vmatprep.subr.mxu0 %v1237
    %1772 = vmatpush1.msra.mxu0 %v1236
    %1773 = vmatprep.subr.mxu0 %v1243
    %1774 = vmatpush1.msra.mxu0 %v1242
    %1775 = vmatprep.subr.mxu0 %v1249
    %1776 = vmatpush1.msra.mxu0 %v1248
    %1777 = vmatprep.subr.mxu0 %v1255
    %1778 = vmatpush1.msra.mxu0 %v1254
    %1779 = vmatprep.subr.mxu0 %v1261
    %1780 = vmatpush1.msra.mxu0 %v1260
    %1781 = vmatprep.subr.mxu0 %v1267
    %1782 = vmatpush1.msra.mxu0 %v1266
    %1783 = vmatprep.subr.mxu0 %v1273
    %1784 = vmatpush1.msra.mxu0 %v1272
    %1785 = vmatprep.subr.mxu0 %v1279
    %1786 = vmatpush1.msra.mxu0 %v1278
    %1787 = vmatprep.subr.mxu0 %v1285
    %1788 = vmatpush1.msra.mxu0 %v1284
    %1789 = vmatprep.subr.mxu0 %v1291
    %1790 = vmatpush1.msra.mxu0 %v1290
    %1791 = vmatprep.subr.mxu0 %v1297
    %1792 = vmatpush1.msra.mxu0 %v1296
    %1793 = vmatprep.subr.mxu0 %v1303
    %1794 = vmatpush1.msra.mxu0 %v1302
    %1795 = vmatprep.subr.mxu0 %v1309
    %1796 = vmatpush1.msra.mxu0 %v1308
    %1797 = vmatprep.subr.mxu0 %v1315
    %1798 = vmatpush1.msra.mxu0 %v1314
    %1799 = vmatprep.subr.mxu0 %v1321
    %1800 = vmatpush1.msra.mxu0 %v1320
    %1801 = vmatprep.subr.mxu0 %v1327
    %1802 = vmatpush1.msra.mxu0 %v1326
    %1803 = vmatprep.subr.mxu0 %v1333
    %1804 = vmatpush1.msra.mxu0 %v1332
    %1805 = vmatprep.subr.mxu0 %v1339
    %1806 = vmatpush1.msra.mxu0 %v1338
    %1807 = vmatprep.subr.mxu0 %v1345
    %1808 = vmatpush1.msra.mxu0 %v1344
    %1809 = vmatprep.subr.mxu0 %v1351
    %1810 = vmatpush1.msra.mxu0 %v1350
    %1811 = vmatprep.subr.mxu0 %v1357
    %1812 = vmatpush1.msra.mxu0 %v1356
    %1813 = vmatprep.subr.mxu0 %v1363
    %1814 = vmatpush1.msra.mxu0 %v1362
    %1815 = vmatprep.mubr.f32.mxu0 %v979
    %1816 = vmatmul.mubr.f32.gmra.mrb[0].mxu0 %v978
    %v1817 = vpop.f32.mrb[0].mxu0
    %v1818 = vadd.f32 %v1747, %v1817
    %v1819 = vpop.f32.mrb[0].mxu0
    %v1820 = vadd.f32 %v1749, %v1819
    %1821 = vdwg.mxu0
    %v1822 = vmax.f32 %v1534, 0.0
    %v1823 = vmax.f32 %v1536, 0.0
    %v1824 = vmax.f32 %v1676, 0.0
    %v1825 = vmax.f32 %v1678, 0.0
    %v1826 = vmax.f32 %v1818, 0.0
    %v1827 = vmax.f32 %v1820, 0.0
    %v1828 = vld [vmem:[#allocation11] sm:$0xff]
    %v1829 = vld [vmem:[#allocation11 + $0x8] sm:$0xff]
    %v1830 = vld [vmem:[#allocation11 + $0x10] sm:$0xff]
    %v1831 = vld [vmem:[#allocation11 + $0x18] sm:$0xff]
    %v1832 = vld [vmem:[#allocation11 + $0x20] sm:$0xff]
    %v1833 = vld [vmem:[#allocation11 + $0x28] sm:$0xff]
    %v1834 = vld [vmem:[#allocation11 + $0x30] sm:$0xff]
    %v1835 = vld [vmem:[#allocation11 + $0x38] sm:$0xff]
    %v1836 = vld [vmem:[#allocation11 + $0x40] sm:$0xff]
    %v1837 = vld [vmem:[#allocation11 + $0x48] sm:$0xff]
    %v1838 = vld [vmem:[#allocation11 + $0x50] sm:$0xff]
    %v1839 = vld [vmem:[#allocation11 + $0x58] sm:$0xff]
    %v1840 = vld [vmem:[#allocation11 + $0x60] sm:$0xff]
    %v1841 = vld [vmem:[#allocation11 + $0x68] sm:$0xff]
    %v1842 = vld [vmem:[#allocation11 + $0x70] sm:$0xff]
    %v1843 = vld [vmem:[#allocation11 + $0x78] sm:$0xff]
    %v1844 = vld [vmem:[#allocation11 + $0x80] sm:$0xff]
    %v1845 = vld [vmem:[#allocation11 + $0x88] sm:$0xff]
    %v1846 = vld [vmem:[#allocation11 + $0x90] sm:$0xff]
    %v1847 = vld [vmem:[#allocation11 + $0x98] sm:$0xff]
    %v1848 = vld [vmem:[#allocation11 + $0xa0] sm:$0xff]
    %v1849 = vld [vmem:[#allocation11 + $0xa8] sm:$0xff]
    %v1850 = vld [vmem:[#allocation11 + $0xb0] sm:$0xff]
    %v1851 = vld [vmem:[#allocation11 + $0xb8] sm:$0xff]
    %v1852 = vld [vmem:[#allocation11 + $0xc0] sm:$0xff]
    %v1853 = vld [vmem:[#allocation11 + $0xc8] sm:$0xff]
    %v1854 = vld [vmem:[#allocation11 + $0xd0] sm:$0xff]
    %v1855 = vld [vmem:[#allocation11 + $0xd8] sm:$0xff]
    %v1856 = vld [vmem:[#allocation11 + $0xe0] sm:$0xff]
    %v1857 = vld [vmem:[#allocation11 + $0xe8] sm:$0xff]
    %v1858 = vld [vmem:[#allocation11 + $0xf0] sm:$0xff]
    %v1859 = vld [vmem:[#allocation11 + $0xf8] sm:$0xff]
    %v1860 = vld [vmem:[#allocation11 + $0x100] sm:$0xff]
    %v1861 = vld [vmem:[#allocation11 + $0x108] sm:$0xff]
    %v1862 = vld [vmem:[#allocation11 + $0x110] sm:$0xff]
    %v1863 = vld [vmem:[#allocation11 + $0x118] sm:$0xff]
    %v1864 = vld [vmem:[#allocation11 + $0x120] sm:$0xff]
    %v1865 = vld [vmem:[#allocation11 + $0x128] sm:$0xff]
    %v1866 = vld [vmem:[#allocation11 + $0x130] sm:$0xff]
    %v1867 = vld [vmem:[#allocation11 + $0x138] sm:$0xff]
    %v1868 = vld [vmem:[#allocation11 + $0x140] sm:$0xff]
    %v1869 = vld [vmem:[#allocation11 + $0x148] sm:$0xff]
    %v1870 = vld [vmem:[#allocation11 + $0x150] sm:$0xff]
    %v1871 = vld [vmem:[#allocation11 + $0x158] sm:$0xff]
    %v1872 = vld [vmem:[#allocation11 + $0x160] sm:$0xff]
    %v1873 = vld [vmem:[#allocation11 + $0x168] sm:$0xff]
    %v1874 = vld [vmem:[#allocation11 + $0x170] sm:$0xff]
    %v1875 = vld [vmem:[#allocation11 + $0x178] sm:$0xff]
    %v1876 = vld [vmem:[#allocation11 + $0x180] sm:$0xff]
    %v1877 = vld [vmem:[#allocation11 + $0x188] sm:$0xff]
    %v1878 = vld [vmem:[#allocation11 + $0x190] sm:$0xff]
    %v1879 = vld [vmem:[#allocation11 + $0x198] sm:$0xff]
    %v1880 = vld [vmem:[#allocation11 + $0x1a0] sm:$0xff]
    %v1881 = vld [vmem:[#allocation11 + $0x1a8] sm:$0xff]
    %v1882 = vld [vmem:[#allocation11 + $0x1b0] sm:$0xff]
    %v1883 = vld [vmem:[#allocation11 + $0x1b8] sm:$0xff]
    %v1884 = vld [vmem:[#allocation11 + $0x1c0] sm:$0xff]
    %v1885 = vld [vmem:[#allocation11 + $0x1c8] sm:$0xff]
    %v1886 = vld [vmem:[#allocation11 + $0x1d0] sm:$0xff]
    %v1887 = vld [vmem:[#allocation11 + $0x1d8] sm:$0xff]
    %v1888 = vld [vmem:[#allocation11 + $0x1e0] sm:$0xff]
    %v1889 = vld [vmem:[#allocation11 + $0x1e8] sm:$0xff]
    %v1890 = vld [vmem:[#allocation11 + $0x1f0] sm:$0xff]
    %v1891 = vld [vmem:[#allocation11 + $0x1f8] sm:$0xff]
    %v1892 = vld [vmem:[#allocation11 + $0x200] sm:$0xff]
    %v1893 = vld [vmem:[#allocation11 + $0x208] sm:$0xff]
    %v1894 = vld [vmem:[#allocation11 + $0x210] sm:$0xff]
    %v1895 = vld [vmem:[#allocation11 + $0x218] sm:$0xff]
    %v1896 = vld [vmem:[#allocation11 + $0x220] sm:$0xff]
    %v1897 = vld [vmem:[#allocation11 + $0x228] sm:$0xff]
    %v1898 = vld [vmem:[#allocation11 + $0x230] sm:$0xff]
    %v1899 = vld [vmem:[#allocation11 + $0x238] sm:$0xff]
    %v1900 = vld [vmem:[#allocation11 + $0x240] sm:$0xff]
    %v1901 = vld [vmem:[#allocation11 + $0x248] sm:$0xff]
    %v1902 = vld [vmem:[#allocation11 + $0x250] sm:$0xff]
    %v1903 = vld [vmem:[#allocation11 + $0x258] sm:$0xff]
    %v1904 = vld [vmem:[#allocation11 + $0x260] sm:$0xff]
    %v1905 = vld [vmem:[#allocation11 + $0x268] sm:$0xff]
    %v1906 = vld [vmem:[#allocation11 + $0x270] sm:$0xff]
    %v1907 = vld [vmem:[#allocation11 + $0x278] sm:$0xff]
    %v1908 = vld [vmem:[#allocation11 + $0x280] sm:$0xff]
    %v1909 = vld [vmem:[#allocation11 + $0x288] sm:$0xff]
    %v1910 = vld [vmem:[#allocation11 + $0x290] sm:$0xff]
    %v1911 = vld [vmem:[#allocation11 + $0x298] sm:$0xff]
    %v1912 = vld [vmem:[#allocation11 + $0x2a0] sm:$0xff]
    %v1913 = vld [vmem:[#allocation11 + $0x2a8] sm:$0xff]
    %v1914 = vld [vmem:[#allocation11 + $0x2b0] sm:$0xff]
    %v1915 = vld [vmem:[#allocation11 + $0x2b8] sm:$0xff]
    %v1916 = vld [vmem:[#allocation11 + $0x2c0] sm:$0xff]
    %v1917 = vld [vmem:[#allocation11 + $0x2c8] sm:$0xff]
    %v1918 = vld [vmem:[#allocation11 + $0x2d0] sm:$0xff]
    %v1919 = vld [vmem:[#allocation11 + $0x2d8] sm:$0xff]
    %v1920 = vld [vmem:[#allocation11 + $0x2e0] sm:$0xff]
    %v1921 = vld [vmem:[#allocation11 + $0x2e8] sm:$0xff]
    %v1922 = vld [vmem:[#allocation11 + $0x2f0] sm:$0xff]
    %v1923 = vld [vmem:[#allocation11 + $0x2f8] sm:$0xff]
    %v1924 = vld [vmem:[#allocation13] sm:$0x1]
    %v1926 = vlaneseq
    %v1927 = vshrl.u32 %v1926, 7
    %v1928 = vsub.s32 0, %v1927
    %v1929 = vrot.slane %v1924, %v1928
    %1931 = vmatprep.subr.mxu0 0.0
    %1932 = vmatpush1.msra.mxu0 %v1828
    %1933 = vmatprep.subr.mxu0 0.0
    %1934 = vmatpush1.msra.mxu0 %v1829
    %1935 = vmatprep.subr.mxu0 0.0
    %1936 = vmatpush1.msra.mxu0 %v1830
    %1937 = vmatprep.subr.mxu0 0.0
    %1938 = vmatpush1.msra.mxu0 %v1831
    %1939 = vmatprep.subr.mxu0 0.0
    %1940 = vmatpush1.msra.mxu0 %v1832
    %1941 = vmatprep.subr.mxu0 0.0
    %1942 = vmatpush1.msra.mxu0 %v1833
    %1943 = vmatprep.subr.mxu0 0.0
    %1944 = vmatpush1.msra.mxu0 %v1834
    %1945 = vmatprep.subr.mxu0 0.0
    %1946 = vmatpush1.msra.mxu0 %v1835
    %1947 = vmatprep.subr.mxu0 0.0
    %1948 = vmatpush1.msra.mxu0 %v1836
    %1949 = vmatprep.subr.mxu0 0.0
    %1950 = vmatpush1.msra.mxu0 %v1837
    %1951 = vmatprep.subr.mxu0 0.0
    %1952 = vmatpush1.msra.mxu0 %v1838
    %1953 = vmatprep.subr.mxu0 0.0
    %1954 = vmatpush1.msra.mxu0 %v1839
    %1955 = vmatprep.subr.mxu0 0.0
    %1956 = vmatpush1.msra.mxu0 %v1840
    %1957 = vmatprep.subr.mxu0 0.0
    %1958 = vmatpush1.msra.mxu0 %v1841
    %1959 = vmatprep.subr.mxu0 0.0
    %1960 = vmatpush1.msra.mxu0 %v1842
    %1961 = vmatprep.subr.mxu0 0.0
    %1962 = vmatpush1.msra.mxu0 %v1843
    %1963 = vmatprep.subr.mxu0 0.0
    %1964 = vmatpush1.msra.mxu0 %v1844
    %1965 = vmatprep.subr.mxu0 0.0
    %1966 = vmatpush1.msra.mxu0 %v1845
    %1967 = vmatprep.subr.mxu0 0.0
    %1968 = vmatpush1.msra.mxu0 %v1846
    %1969 = vmatprep.subr.mxu0 0.0
    %1970 = vmatpush1.msra.mxu0 %v1847
    %1971 = vmatprep.subr.mxu0 0.0
    %1972 = vmatpush1.msra.mxu0 %v1848
    %1973 = vmatprep.subr.mxu0 0.0
    %1974 = vmatpush1.msra.mxu0 %v1849
    %1975 = vmatprep.subr.mxu0 0.0
    %1976 = vmatpush1.msra.mxu0 %v1850
    %1977 = vmatprep.subr.mxu0 0.0
    %1978 = vmatpush1.msra.mxu0 %v1851
    %1979 = vmatprep.subr.mxu0 0.0
    %1980 = vmatpush1.msra.mxu0 %v1852
    %1981 = vmatprep.subr.mxu0 0.0
    %1982 = vmatpush1.msra.mxu0 %v1853
    %1983 = vmatprep.subr.mxu0 0.0
    %1984 = vmatpush1.msra.mxu0 %v1854
    %1985 = vmatprep.subr.mxu0 0.0
    %1986 = vmatpush1.msra.mxu0 %v1855
    %1987 = vmatprep.subr.mxu0 0.0
    %1988 = vmatpush1.msra.mxu0 %v1856
    %1989 = vmatprep.subr.mxu0 0.0
    %1990 = vmatpush1.msra.mxu0 %v1857
    %1991 = vmatprep.subr.mxu0 0.0
    %1992 = vmatpush1.msra.mxu0 %v1858
    %1993 = vmatprep.subr.mxu0 0.0
    %1994 = vmatpush1.msra.mxu0 %v1859
    %1995 = vmatprep.mubr.f32.mxu0 %v1823
    %1996 = vmatmul.mubr.f32.gmra.mrb[0].mxu0 %v1822
    %v1997 = vpop.f32.mrb[0].mxu0
    %v1998 = vadd.f32 %v1929, %v1997
    %v1999 = vpop.f32.mrb[0].mxu0
    %2000 = vdwg.mxu0
    %2001 = vmatprep.subr.mxu0 0.0
    %2002 = vmatpush1.msra.mxu0 %v1860
    %2003 = vmatprep.subr.mxu0 0.0
    %2004 = vmatpush1.msra.mxu0 %v1861
    %2005 = vmatprep.subr.mxu0 0.0
    %2006 = vmatpush1.msra.mxu0 %v1862
    %2007 = vmatprep.subr.mxu0 0.0
    %2008 = vmatpush1.msra.mxu0 %v1863
    %2009 = vmatprep.subr.mxu0 0.0
    %2010 = vmatpush1.msra.mxu0 %v1864
    %2011 = vmatprep.subr.mxu0 0.0
    %2012 = vmatpush1.msra.mxu0 %v1865
    %2013 = vmatprep.subr.mxu0 0.0
    %2014 = vmatpush1.msra.mxu0 %v1866
    %2015 = vmatprep.subr.mxu0 0.0
    %2016 = vmatpush1.msra.mxu0 %v1867
    %2017 = vmatprep.subr.mxu0 0.0
    %2018 = vmatpush1.msra.mxu0 %v1868
    %2019 = vmatprep.subr.mxu0 0.0
    %2020 = vmatpush1.msra.mxu0 %v1869
    %2021 = vmatprep.subr.mxu0 0.0
    %2022 = vmatpush1.msra.mxu0 %v1870
    %2023 = vmatprep.subr.mxu0 0.0
    %2024 = vmatpush1.msra.mxu0 %v1871
    %2025 = vmatprep.subr.mxu0 0.0
    %2026 = vmatpush1.msra.mxu0 %v1872
    %2027 = vmatprep.subr.mxu0 0.0
    %2028 = vmatpush1.msra.mxu0 %v1873
    %2029 = vmatprep.subr.mxu0 0.0
    %2030 = vmatpush1.msra.mxu0 %v1874
    %2031 = vmatprep.subr.mxu0 0.0
    %2032 = vmatpush1.msra.mxu0 %v1875
    %2033 = vmatprep.subr.mxu0 0.0
    %2034 = vmatpush1.msra.mxu0 %v1876
    %2035 = vmatprep.subr.mxu0 0.0
    %2036 = vmatpush1.msra.mxu0 %v1877
    %2037 = vmatprep.subr.mxu0 0.0
    %2038 = vmatpush1.msra.mxu0 %v1878
    %2039 = vmatprep.subr.mxu0 0.0
    %2040 = vmatpush1.msra.mxu0 %v1879
    %2041 = vmatprep.subr.mxu0 0.0
    %2042 = vmatpush1.msra.mxu0 %v1880
    %2043 = vmatprep.subr.mxu0 0.0
    %2044 = vmatpush1.msra.mxu0 %v1881
    %2045 = vmatprep.subr.mxu0 0.0
    %2046 = vmatpush1.msra.mxu0 %v1882
    %2047 = vmatprep.subr.mxu0 0.0
    %2048 = vmatpush1.msra.mxu0 %v1883
    %2049 = vmatprep.subr.mxu0 0.0
    %2050 = vmatpush1.msra.mxu0 %v1884
    %2051 = vmatprep.subr.mxu0 0.0
    %2052 = vmatpush1.msra.mxu0 %v1885
    %2053 = vmatprep.subr.mxu0 0.0
    %2054 = vmatpush1.msra.mxu0 %v1886
    %2055 = vmatprep.subr.mxu0 0.0
    %2056 = vmatpush1.msra.mxu0 %v1887
    %2057 = vmatprep.subr.mxu0 0.0
    %2058 = vmatpush1.msra.mxu0 %v1888
    %2059 = vmatprep.subr.mxu0 0.0
    %2060 = vmatpush1.msra.mxu0 %v1889
    %2061 = vmatprep.subr.mxu0 0.0
    %2062 = vmatpush1.msra.mxu0 %v1890
    %2063 = vmatprep.subr.mxu0 0.0
    %2064 = vmatpush1.msra.mxu0 %v1891
    %2065 = vmatprep.mubr.f32.mxu0 %v1825
    %2066 = vmatmul.mubr.f32.gmra.mrb[0].mxu0 %v1824
    %v2067 = vpop.f32.mrb[0].mxu0
    %v2068 = vadd.f32 %v1998, %v2067
    %v2069 = vpop.f32.mrb[0].mxu0
    %2070 = vdwg.mxu0
    %2071 = vmatprep.subr.mxu0 0.0
    %2072 = vmatpush1.msra.mxu0 %v1892
    %2073 = vmatprep.subr.mxu0 0.0
    %2074 = vmatpush1.msra.mxu0 %v1893
    %2075 = vmatprep.subr.mxu0 0.0
    %2076 = vmatpush1.msra.mxu0 %v1894
    %2077 = vmatprep.subr.mxu0 0.0
    %2078 = vmatpush1.msra.mxu0 %v1895
    %2079 = vmatprep.subr.mxu0 0.0
    %2080 = vmatpush1.msra.mxu0 %v1896
    %2081 = vmatprep.subr.mxu0 0.0
    %2082 = vmatpush1.msra.mxu0 %v1897
    %2083 = vmatprep.subr.mxu0 0.0
    %2084 = vmatpush1.msra.mxu0 %v1898
    %2085 = vmatprep.subr.mxu0 0.0
    %2086 = vmatpush1.msra.mxu0 %v1899
    %2087 = vmatprep.subr.mxu0 0.0
    %2088 = vmatpush1.msra.mxu0 %v1900
    %2089 = vmatprep.subr.mxu0 0.0
    %2090 = vmatpush1.msra.mxu0 %v1901
    %2091 = vmatprep.subr.mxu0 0.0
    %2092 = vmatpush1.msra.mxu0 %v1902
    %2093 = vmatprep.subr.mxu0 0.0
    %2094 = vmatpush1.msra.mxu0 %v1903
    %2095 = vmatprep.subr.mxu0 0.0
    %2096 = vmatpush1.msra.mxu0 %v1904
    %2097 = vmatprep.subr.mxu0 0.0
    %2098 = vmatpush1.msra.mxu0 %v1905
    %2099 = vmatprep.subr.mxu0 0.0
    %2100 = vmatpush1.msra.mxu0 %v1906
    %2101 = vmatprep.subr.mxu0 0.0
    %2102 = vmatpush1.msra.mxu0 %v1907
    %2103 = vmatprep.subr.mxu0 0.0
    %2104 = vmatpush1.msra.mxu0 %v1908
    %2105 = vmatprep.subr.mxu0 0.0
    %2106 = vmatpush1.msra.mxu0 %v1909
    %2107 = vmatprep.subr.mxu0 0.0
    %2108 = vmatpush1.msra.mxu0 %v1910
    %2109 = vmatprep.subr.mxu0 0.0
    %2110 = vmatpush1.msra.mxu0 %v1911
    %2111 = vmatprep.subr.mxu0 0.0
    %2112 = vmatpush1.msra.mxu0 %v1912
    %2113 = vmatprep.subr.mxu0 0.0
    %2114 = vmatpush1.msra.mxu0 %v1913
    %2115 = vmatprep.subr.mxu0 0.0
    %2116 = vmatpush1.msra.mxu0 %v1914
    %2117 = vmatprep.subr.mxu0 0.0
    %2118 = vmatpush1.msra.mxu0 %v1915
    %2119 = vmatprep.subr.mxu0 0.0
    %2120 = vmatpush1.msra.mxu0 %v1916
    %2121 = vmatprep.subr.mxu0 0.0
    %2122 = vmatpush1.msra.mxu0 %v1917
    %2123 = vmatprep.subr.mxu0 0.0
    %2124 = vmatpush1.msra.mxu0 %v1918
    %2125 = vmatprep.subr.mxu0 0.0
    %2126 = vmatpush1.msra.mxu0 %v1919
    %2127 = vmatprep.subr.mxu0 0.0
    %2128 = vmatpush1.msra.mxu0 %v1920
    %2129 = vmatprep.subr.mxu0 0.0
    %2130 = vmatpush1.msra.mxu0 %v1921
    %2131 = vmatprep.subr.mxu0 0.0
    %2132 = vmatpush1.msra.mxu0 %v1922
    %2133 = vmatprep.subr.mxu0 0.0
    %2134 = vmatpush1.msra.mxu0 %v1923
    %2135 = vmatprep.mubr.f32.mxu0 %v1827
    %2136 = vmatmul.mubr.f32.gmra.mrb[0].mxu0 %v1826
    %v2137 = vpop.f32.mrb[0].mxu0
    %v2138 = vadd.f32 %v2068, %v2137
    %v2139 = vpop.f32.mrb[0].mxu0
    %2140 = vdwg.mxu0
    %2141 = vst [vmem:[#allocation14] sm:$0xff] %v2138
    // Predicated region
    $region58: #{tpu_custom_call.1} parent=1 // pred_check
      _
    $region59: #{tpu_custom_call.1} parent=1 // pred_check_branch
      %2143 = sbr.rel (0) target = $region61
    $region60: #{tpu_custom_call.1} parent=1 // pred_region
      %s2145 = ssub.s32 128, 128
      %2146 = vsyncadd [#allocation4], %s2145
      %s2148 = sshll.u32 [#allocation14], 4
      %s2149 = int_to_ptr.vmem [resolvable:$true] %s2148
      %2151 = dma.vmem_to_hbm [thread:$0]  %s2149, 128, %s7, [#allocation4]
    $region61: #{tpu_custom_call.1} parent=1 // pred_fallthru
      _
    // Predicated region
    $region62: #{tpu_custom_call.1} parent=1 // pred_check
      _
    $region63: #{tpu_custom_call.1} parent=1 // pred_check_branch
      %2153 = sbr.rel (0) target = $region65
    $region64: #{tpu_custom_call.1} parent=1 // pred_region
      %2154 = dma.done [#allocation4], 128
    $region65: #{tpu_custom_call.1} parent=1 // pred_fallthru
      _
    %2155 = vsyncpa [#allocation3], 1
    %2156 = vsyncpa [#allocation6], 1
    %2157 = vsyncpa [#allocation9], 1
    %2158 = vsyncpa [#allocation12], 1
    %2159 = vsyncpa [#allocation4], 1

</llo_original>
